<compile_context>
chip_gen: v6e
topology: v6e:2x2x1
jax: 0.10.0
libtpu: 0.0.40
codegen_flags: <defaults>
</compile_context>

<pallas_src>
import functools

import jax
import jax.numpy as jnp
from jax.experimental import pallas as pl
from jax.experimental.pallas import tpu as pltpu


def _round_up(a, b):
    return (a + b - 1) // b * b


def value_decoder_kernel(x_ref, wcat_ref, w1m_ref, w1x_ref, b1_ref,
                         w2_ref, b2_ref, w3p_ref, b3p_ref, out_ref,
                         *, n_nodes):
    """ValueDecoder forward for one batch tile.

    x_ref:    (TB*N, D)  node embeddings (batch*node rows, flattened in wrapper)
    wcat_ref: (D, E)     fused [project_node.W | project_graph.W]
    w1m/w1x:  (E, E)     fc1 with the fusion mean/max algebra pre-folded
    w3p/b3p:  (H2, 128)/(1, 128)  fc3 zero-padded to 128 lanes (lane-dense store)
    out_ref:  (TB, 128)  value lives in lane 0
    """
    wdt = wcat_ref.dtype
    # Full f32 matmul passes only when operands are f32 (exactness vs. the
    # reference); bf16 operands take the native single-pass MXU path.
    prec = jax.lax.Precision.HIGHEST if wdt == jnp.float32 else None

    x2 = x_ref[...]                                           # (TB*N, D)
    tb = x2.shape[0] // n_nodes
    inv_n = jnp.float32(1.0 / n_nodes)

    # One fused projection: proj = x @ [Wn | Wg]  ->  [node_half | graph_half]
    proj = jnp.dot(x2, wcat_ref[...], precision=prec,
                   preferred_element_type=jnp.float32)        # (TB*N, E) f32
    # Group node rows per graph for the two reductions (value reshape only;
    # the input ref itself is never reshaped).
    proj3 = proj.reshape(tb, n_nodes, proj.shape[-1])         # (TB, N, E)

    pm = jnp.sum(proj3, axis=1) * inv_n                       # (TB, E) node-mean
    pmax = jnp.max(proj3, axis=1)                             # (TB, E) node-max

    # fc1 with mean/max/bias algebra folded into W1m / W1x / b1c (see wrapper):
    #   h1_pre = f_mean @ w1a + f_max @ w1b + b1
    #          = pm @ W1m + pmax @ W1x + b1c
    h1 = jnp.maximum(
        jnp.dot(pm.astype(wdt), w1m_ref[...], precision=prec,
                preferred_element_type=jnp.float32)
        + jnp.dot(pmax.astype(wdt), w1x_ref[...], precision=prec,
                  preferred_element_type=jnp.float32)
        + b1_ref[...], 0.0)                                   # (TB, E)

    h2 = jnp.maximum(
        jnp.dot(h1.astype(wdt), w2_ref[...], precision=prec,
                preferred_element_type=jnp.float32)
        + b2_ref[...], 0.0)                                   # (TB, H2)

    # fc3 padded to 128 output lanes -> unmasked, lane-dense store.
    out_ref[...] = (jnp.dot(h2.astype(wdt), w3p_ref[...], precision=prec,
                            preferred_element_type=jnp.float32)
                    + b3p_ref[...])                           # (TB, 128)


def init_critic_params(key, hidden_dim, embedding_dim, mlp_hidden2=64):
    """Deterministic synthetic parameters (PyTorch-Linear-style uniform init)."""
    e2 = embedding_dim // 2

    def linear(k, fan_in, fan_out):
        kw, kb = jax.random.split(k)
        bound = 1.0 / jnp.sqrt(jnp.float32(fan_in))
        # stored already transposed: (fan_in, fan_out), bias as (1, fan_out)
        w = jax.random.uniform(kw, (fan_in, fan_out), jnp.float32, -bound, bound)
        b = jax.random.uniform(kb, (1, fan_out), jnp.float32, -bound, bound)
        return w, b

    ks = jax.random.split(key, 5)
    wg, bg = linear(ks[0], hidden_dim, e2)                  # project_graph
    wn, bn = linear(ks[1], hidden_dim, e2)                  # project_node
    w1, b1 = linear(ks[2], embedding_dim, embedding_dim)    # MLP.fc1
    w2, b2 = linear(ks[3], embedding_dim, mlp_hidden2)      # MLP.fc2
    w3, b3 = linear(ks[4], mlp_hidden2, 1)                  # MLP.fc3
    # fc1 consumes concat([fusion.mean, fusion.max]); split into the two halves
    w1a, w1b = w1[:e2], w1[e2:]
    return dict(wg=wg, bg=bg, wn=wn, bn=bn, w1a=w1a, w1b=w1b, b1=b1,
                w2=w2, b2=b2, w3=w3, b3=b3)


_TB_TARGET = 512   # batch rows per grid step (TB*N rows feed each MXU push)


@functools.partial(jax.jit, static_argnames=("param_dtype",))
def critic_forward(x, params, *, param_dtype=jnp.float32):
    """Returns (baseline_value.detach().squeeze(), baseline_value.squeeze())."""
    B, N, D = x.shape
    p = params
    e2 = p["wg"].shape[1]
    H2 = p["w2"].shape[1]
    hp = jax.lax.Precision.HIGHEST

    # ---- wrapper-side weight packing (pure layout plumbing, fused by XLA) ----
    # fused node/graph projection
    wcat = jnp.concatenate([p["wn"], p["wg"]], axis=1)                    # (D, E)
    # fold fusion mean/max + bn/bg biases into fc1:
    #   f_mean = pm[:, :e2] + pm[:, e2:] + bn + bg
    #   f_max  = pmax[:, :e2] + pm[:, e2:] + bn + bg
    #   h1_pre = f_mean @ w1a + f_max @ w1b + b1 = pm @ W1m + pmax @ W1x + b1c
    w1m = jnp.concatenate([p["w1a"], p["w1a"] + p["w1b"]], axis=0)        # (E, E)
    w1x = jnp.concatenate([p["w1b"], jnp.zeros_like(p["w1b"])], axis=0)   # (E, E)
    b1c = p["b1"] + jnp.dot(p["bn"] + p["bg"], p["w1a"] + p["w1b"],
                            precision=hp)                                 # (1, E)
    # fc3 zero-padded to 128 output lanes so the kernel store is lane-dense
    w3p = jnp.zeros((H2, 128), jnp.float32).at[:, :1].set(p["w3"])
    b3p = jnp.zeros((1, 128), jnp.float32).at[:, :1].set(p["b3"])

    # matmul operands in param_dtype (bf16 on v6e/v7x halves HBM/VMEM bytes);
    # biases and all in-kernel accumulation/elementwise stay f32 (v5e-friendly).
    wcat = wcat.astype(param_dtype)
    w1m = w1m.astype(param_dtype)
    w1x = w1x.astype(param_dtype)
    w2 = p["w2"].astype(param_dtype)
    w3p = w3p.astype(param_dtype)
    b1 = b1c
    b2 = p["b2"]

    # ---- batch tiling: pipelined "parallel" grid over batch tiles ----
    TB = min(_TB_TARGET, _round_up(B, 8))
    B_pad = _round_up(B, TB)
    x2 = x.reshape(B * N, D).astype(param_dtype)          # flatten in the wrapper
    if B_pad != B:
        x2 = jnp.pad(x2, ((0, (B_pad - B) * N), (0, 0)))

    def const_spec(a):   # weights stay VMEM-resident across all grid steps
        return pl.BlockSpec(a.shape, lambda i: (0, 0))

    kernel = functools.partial(value_decoder_kernel, n_nodes=N)

    out = pl.pallas_call(
        kernel,
        out_shape=jax.ShapeDtypeStruct((B_pad, 128), jnp.float32),
        grid=(B_pad // TB,),
        in_specs=[
            pl.BlockSpec((TB * N, D), lambda i: (i, 0)),
            const_spec(wcat),
            const_spec(w1m), const_spec(w1x), const_spec(b1),
            const_spec(w2), const_spec(b2),
            const_spec(w3p), const_spec(b3p),
        ],
        out_specs=pl.BlockSpec((TB, 128), lambda i: (i, 0)),
        compiler_params=pltpu.CompilerParams(
            dimension_semantics=("parallel",)),
    )(x2, wcat, w1m, w1x, b1, w2, b2, w3p, b3p)

    baseline_value = out[:B, 0]            # drop batch padding, take lane 0
    return jax.lax.stop_gradient(baseline_value), baseline_value


def critic_forward_ref(x, p):
    """Pure-JAX reference of the un-folded forward (for a correctness check)."""
    hp = jax.lax.Precision.HIGHEST
    mean_pool = x.mean(axis=1)
    graph_feat = jnp.dot(mean_pool, p["wg"], precision=hp) + p["bg"]
    node_feat = jnp.einsum("bnd,de->bne", x, p["wn"], precision=hp) + p["bn"][None]
    fusion = node_feat + graph_feat[:, None, :]
    feat_mean, feat_max = fusion.mean(axis=1), fusion.max(axis=1)
    h1 = jax.nn.relu(jnp.dot(feat_mean, p["w1a"], precision=hp)
                     + jnp.dot(feat_max, p["w1b"], precision=hp) + p["b1"])
    h2 = jax.nn.relu(jnp.dot(h1, p["w2"], precision=hp) + p["b2"])
    v = (jnp.dot(h2, p["w3"], precision=hp) + p["b3"])[:, 0]
    return jax.lax.stop_gradient(v), v


if __name__ == "__main__":
    # Small shapes consistent with Critic(problem_name='tsp', embedding_dim=32,
    # hidden_dim=32, graph_size=8); forward input AM_embedding_new is
    # (batch, graph_size, hidden_dim).
    B, N, HIDDEN, EMBED = 2, 8, 32, 32

    key = jax.random.PRNGKey(0)
    k_x, k_p = jax.random.split(key)
    x = jax.random.normal(k_x, (B, N, HIDDEN), dtype=jnp.float32)
    params = init_critic_params(k_p, HIDDEN, EMBED)

    # f32 path (exact within f32 rounding of the reference)
    detached, value = critic_forward(x, params)
    jax.block_until_ready((detached, value))

    ref_detached, ref_value = critic_forward_ref(x, params)
    assert detached.shape == (B,) and value.shape == (B,)
    assert jnp.allclose(value, ref_value, atol=1e-4, rtol=1e-4)
    assert jnp.allclose(detached, value)

    # bf16 matmul-operand path (v6e/v7x MXU-native; f32 accumulation kept)
    _, value_bf16 = critic_forward(x, params, param_dtype=jnp.bfloat16)
    jax.block_until_ready(value_bf16)
    assert jnp.allclose(value_bf16, ref_value, atol=5e-2, rtol=5e-2)

    print("KERNEL_OK")
</pallas_src>

<mosaic_0001>
module attributes {stable_mosaic.version = 11 : i64} {
  func.func @value_decoder_kernel(%arg0: i32, %arg1: memref<64x32xf32, #tpu.memory_space<vmem>>, %arg2: memref<32x32xf32, #tpu.memory_space<vmem>>, %arg3: memref<32x32xf32, #tpu.memory_space<vmem>>, %arg4: memref<32x32xf32, #tpu.memory_space<vmem>>, %arg5: memref<1x32xf32, #tpu.memory_space<vmem>>, %arg6: memref<32x64xf32, #tpu.memory_space<vmem>>, %arg7: memref<1x64xf32, #tpu.memory_space<vmem>>, %arg8: memref<64x128xf32, #tpu.memory_space<vmem>>, %arg9: memref<1x128xf32, #tpu.memory_space<vmem>>, %arg10: memref<8x128xf32, #tpu.memory_space<vmem>>) attributes {dimension_semantics = [#tpu.dimension_semantics<parallel>], iteration_bounds = array<i64: 1>, scalar_prefetch = 0 : i64, scratch_operands = 0 : i64, tpu.core_type = #tpu.core_type<tc>, window_params = [{transform_indices = @transform_0, window_bounds = array<i64: 64, 32>}, {pipeline_mode = #tpu.pipeline_mode<synchronous>, transform_indices = @transform_1, window_bounds = array<i64: 32, 32>}, {pipeline_mode = #tpu.pipeline_mode<synchronous>, transform_indices = @transform_2, window_bounds = array<i64: 32, 32>}, {pipeline_mode = #tpu.pipeline_mode<synchronous>, transform_indices = @transform_3, window_bounds = array<i64: 32, 32>}, {pipeline_mode = #tpu.pipeline_mode<synchronous>, transform_indices = @transform_4, window_bounds = array<i64: 1, 32>}, {pipeline_mode = #tpu.pipeline_mode<synchronous>, transform_indices = @transform_5, window_bounds = array<i64: 32, 64>}, {pipeline_mode = #tpu.pipeline_mode<synchronous>, transform_indices = @transform_6, window_bounds = array<i64: 1, 64>}, {pipeline_mode = #tpu.pipeline_mode<synchronous>, transform_indices = @transform_7, window_bounds = array<i64: 64, 128>}, {pipeline_mode = #tpu.pipeline_mode<synchronous>, transform_indices = @transform_8, window_bounds = array<i64: 1, 128>}, {transform_indices = @transform_9, window_bounds = array<i64: 8, 128>}]} {
    %c0 = arith.constant 0 : index
    %c0_0 = arith.constant 0 : index
    %0 = vector.load %arg1[%c0, %c0_0] : memref<64x32xf32, #tpu.memory_space<vmem>>, vector<64x32xf32>
    %c0_1 = arith.constant 0 : index
    %c0_2 = arith.constant 0 : index
    %1 = vector.load %arg2[%c0_1, %c0_2] : memref<32x32xf32, #tpu.memory_space<vmem>>, vector<32x32xf32>
    %cst = arith.constant dense<0.000000e+00> : vector<64x32xf32>
    %2 = tpu.matmul %0, %1, %cst {dimension_numbers = #tpu.dot_dimension_numbers<[1], [0], [0], [1], [0, 0, 1, 1], [], []>, precision = #tpu.contract_precision<fp32>} : vector<64x32xf32>, vector<32x32xf32>, vector<64x32xf32> -> vector<64x32xf32>
    %3 = vector.shape_cast %2 : vector<64x32xf32> to vector<8x8x32xf32>
    %cst_3 = arith.constant dense<0.000000e+00> : vector<8x32xf32>
    %4 = vector.multi_reduction <add>, %3, %cst_3 [1] : vector<8x8x32xf32> to vector<8x32xf32>
    %cst_4 = arith.constant 1.250000e-01 : f32
    %5 = vector.broadcast %cst_4 : f32 to vector<8x32xf32>
    %6 = arith.mulf %4, %5 : vector<8x32xf32>
    %cst_5 = arith.constant dense<0xFF800000> : vector<8x32xf32>
    %7 = vector.multi_reduction <maximumf>, %3, %cst_5 [1] : vector<8x8x32xf32> to vector<8x32xf32>
    %c0_6 = arith.constant 0 : index
    %c0_7 = arith.constant 0 : index
    %8 = vector.load %arg3[%c0_6, %c0_7] : memref<32x32xf32, #tpu.memory_space<vmem>>, vector<32x32xf32>
    %cst_8 = arith.constant dense<0.000000e+00> : vector<8x32xf32>
    %9 = tpu.matmul %6, %8, %cst_8 {dimension_numbers = #tpu.dot_dimension_numbers<[1], [0], [0], [1], [0, 0, 1, 1], [], []>, precision = #tpu.contract_precision<fp32>} : vector<8x32xf32>, vector<32x32xf32>, vector<8x32xf32> -> vector<8x32xf32>
    %c0_9 = arith.constant 0 : index
    %c0_10 = arith.constant 0 : index
    %10 = vector.load %arg4[%c0_9, %c0_10] : memref<32x32xf32, #tpu.memory_space<vmem>>, vector<32x32xf32>
    %cst_11 = arith.constant dense<0.000000e+00> : vector<8x32xf32>
    %11 = tpu.matmul %7, %10, %cst_11 {dimension_numbers = #tpu.dot_dimension_numbers<[1], [0], [0], [1], [0, 0, 1, 1], [], []>, precision = #tpu.contract_precision<fp32>} : vector<8x32xf32>, vector<32x32xf32>, vector<8x32xf32> -> vector<8x32xf32>
    %12 = arith.addf %9, %11 : vector<8x32xf32>
    %c0_12 = arith.constant 0 : index
    %c0_13 = arith.constant 0 : index
    %13 = vector.load %arg5[%c0_12, %c0_13] : memref<1x32xf32, #tpu.memory_space<vmem>>, vector<1x32xf32>
    %14 = vector.broadcast %13 : vector<1x32xf32> to vector<8x32xf32>
    %15 = arith.addf %12, %14 : vector<8x32xf32>
    %cst_14 = arith.constant 0.000000e+00 : f32
    %16 = vector.broadcast %cst_14 : f32 to vector<8x32xf32>
    %17 = arith.maximumf %15, %16 : vector<8x32xf32>
    %c0_15 = arith.constant 0 : index
    %c0_16 = arith.constant 0 : index
    %18 = vector.load %arg6[%c0_15, %c0_16] : memref<32x64xf32, #tpu.memory_space<vmem>>, vector<32x64xf32>
    %cst_17 = arith.constant dense<0.000000e+00> : vector<8x64xf32>
    %19 = tpu.matmul %17, %18, %cst_17 {dimension_numbers = #tpu.dot_dimension_numbers<[1], [0], [0], [1], [0, 0, 1, 1], [], []>, precision = #tpu.contract_precision<fp32>} : vector<8x32xf32>, vector<32x64xf32>, vector<8x64xf32> -> vector<8x64xf32>
    %c0_18 = arith.constant 0 : index
    %c0_19 = arith.constant 0 : index
    %20 = vector.load %arg7[%c0_18, %c0_19] : memref<1x64xf32, #tpu.memory_space<vmem>>, vector<1x64xf32>
    %21 = vector.broadcast %20 : vector<1x64xf32> to vector<8x64xf32>
    %22 = arith.addf %19, %21 : vector<8x64xf32>
    %cst_20 = arith.constant 0.000000e+00 : f32
    %23 = vector.broadcast %cst_20 : f32 to vector<8x64xf32>
    %24 = arith.maximumf %22, %23 : vector<8x64xf32>
    %c0_21 = arith.constant 0 : index
    %c0_22 = arith.constant 0 : index
    %25 = vector.load %arg8[%c0_21, %c0_22] : memref<64x128xf32, #tpu.memory_space<vmem>>, vector<64x128xf32>
    %cst_23 = arith.constant dense<0.000000e+00> : vector<8x128xf32>
    %26 = tpu.matmul %24, %25, %cst_23 {dimension_numbers = #tpu.dot_dimension_numbers<[1], [0], [0], [1], [0, 0, 1, 1], [], []>, precision = #tpu.contract_precision<fp32>} : vector<8x64xf32>, vector<64x128xf32>, vector<8x128xf32> -> vector<8x128xf32>
    %c0_24 = arith.constant 0 : index
    %c0_25 = arith.constant 0 : index
    %27 = vector.load %arg9[%c0_24, %c0_25] : memref<1x128xf32, #tpu.memory_space<vmem>>, vector<1x128xf32>
    %28 = vector.broadcast %27 : vector<1x128xf32> to vector<8x128xf32>
    %29 = arith.addf %26, %28 : vector<8x128xf32>
    %c0_26 = arith.constant 0 : index
    %c0_27 = arith.constant 0 : index
    %30 = vector.load %arg10[%c0_26, %c0_27] : memref<8x128xf32, #tpu.memory_space<vmem>>, vector<8x128xf32>
    tpu.vector_store %arg10[%c0_26, %c0_27], %29 {strides = array<i32>} : memref<8x128xf32, #tpu.memory_space<vmem>>, vector<8x128xf32>,
    return
  }
  func.func @transform_0(%arg0: i32) -> (i32, i32) {
    %c0_i32 = arith.constant 0 : i32
    %c0_i32_0 = arith.constant 0 : i32
    return %arg0, %c0_i32 : i32, i32
  }
  func.func @transform_1(%arg0: i32) -> (i32, i32) {
    %c0_i32 = arith.constant 0 : i32
    %c0_i32_0 = arith.constant 0 : i32
    %c0_i32_1 = arith.constant 0 : i32
    return %c0_i32, %c0_i32_0 : i32, i32
  }
  func.func @transform_2(%arg0: i32) -> (i32, i32) {
    %c0_i32 = arith.constant 0 : i32
    %c0_i32_0 = arith.constant 0 : i32
    %c0_i32_1 = arith.constant 0 : i32
    return %c0_i32, %c0_i32_0 : i32, i32
  }
  func.func @transform_3(%arg0: i32) -> (i32, i32) {
    %c0_i32 = arith.constant 0 : i32
    %c0_i32_0 = arith.constant 0 : i32
    %c0_i32_1 = arith.constant 0 : i32
    return %c0_i32, %c0_i32_0 : i32, i32
  }
  func.func @transform_4(%arg0: i32) -> (i32, i32) {
    %c0_i32 = arith.constant 0 : i32
    %c0_i32_0 = arith.constant 0 : i32
    %c0_i32_1 = arith.constant 0 : i32
    return %c0_i32, %c0_i32_0 : i32, i32
  }
  func.func @transform_5(%arg0: i32) -> (i32, i32) {
    %c0_i32 = arith.constant 0 : i32
    %c0_i32_0 = arith.constant 0 : i32
    %c0_i32_1 = arith.constant 0 : i32
    return %c0_i32, %c0_i32_0 : i32, i32
  }
  func.func @transform_6(%arg0: i32) -> (i32, i32) {
    %c0_i32 = arith.constant 0 : i32
    %c0_i32_0 = arith.constant 0 : i32
    %c0_i32_1 = arith.constant 0 : i32
    return %c0_i32, %c0_i32_0 : i32, i32
  }
  func.func @transform_7(%arg0: i32) -> (i32, i32) {
    %c0_i32 = arith.constant 0 : i32
    %c0_i32_0 = arith.constant 0 : i32
    %c0_i32_1 = arith.constant 0 : i32
    return %c0_i32, %c0_i32_0 : i32, i32
  }
  func.func @transform_8(%arg0: i32) -> (i32, i32) {
    %c0_i32 = arith.constant 0 : i32
    %c0_i32_0 = arith.constant 0 : i32
    %c0_i32_1 = arith.constant 0 : i32
    return %c0_i32, %c0_i32_0 : i32, i32
  }
  func.func @transform_9(%arg0: i32) -> (i32, i32) {
    %c0_i32 = arith.constant 0 : i32
    %c0_i32_0 = arith.constant 0 : i32
    return %arg0, %c0_i32 : i32, i32
  }
}

</mosaic_0001>

<llo_original>
// kernel: critic_forward.1
$region0: #{critic_forward.1}
  #allocation0 [shape = 'u32[]', space=smem, size = 0x4, offset = 0x4, fixed_abs, tag = 'smem constant byte address 0x4 - core index']
  #allocation1 [shape = 'u32[144,128]{1,0:T(1,128)}', space=vmem, size = 0x12000, scoped, tag = 'internal scratch']
  %s0 = inlined_call_operand.vmem [shape: f32[64,32], index: 0, kind: input, shape index: {}]
  %s1 = inlined_call_operand.vmem [shape: f32[32,32], index: 1, kind: input, shape index: {}]
  %s2 = inlined_call_operand.vmem [shape: f32[32,32], index: 2, kind: input, shape index: {}]
  %s3 = inlined_call_operand.vmem [shape: f32[32,32], index: 3, kind: input, shape index: {}]
  %s4 = inlined_call_operand.vmem [shape: f32[1,32], index: 4, kind: input, shape index: {}]
  %s5 = inlined_call_operand.vmem [shape: f32[32,64], index: 5, kind: input, shape index: {}]
  %s6 = inlined_call_operand.vmem [shape: f32[1,64], index: 6, kind: input, shape index: {}]
  %s7 = inlined_call_operand.vmem [shape: f32[64,128], index: 7, kind: input, shape index: {}]
  %s8 = inlined_call_operand.vmem [shape: f32[1,128], index: 8, kind: input, shape index: {}]
  %s9 = inlined_call_operand.vmem [shape: f32[8,128], index: 9, kind: output, shape index: {}]
  %s10 = sld [smem:[#allocation0]]
  $region46: #{critic_forward.1} parent=0
    _
  %s12 = ssub.s32 1, %s10
  %s13 = scalar_select 0, %s12, %s10
  // Predicated region
  $region2: #{critic_forward.1} parent=0 // pred_check
    _
  $region3: #{critic_forward.1} parent=0 // pred_check_branch
    %15 = sbr.rel (0) target = $region5
  $region4: #{critic_forward.1} parent=0 // pred_region
    _
  $region5: #{critic_forward.1} parent=0 // pred_fallthru
    _
  // Predicated region
  $region6: #{critic_forward.1} parent=0 // pred_check
    _
  $region7: #{critic_forward.1} parent=0 // pred_check_branch
    %17 = sbr.rel (0) target = $region9
  $region8: #{critic_forward.1} parent=0 // pred_region
    _
  $region9: #{critic_forward.1} parent=0 // pred_fallthru
    _
  // Predicated region
  $region10: #{critic_forward.1} parent=0 // pred_check
    _
  $region11: #{critic_forward.1} parent=0 // pred_check_branch
    %19 = sbr.rel (0) target = $region13
  $region12: #{critic_forward.1} parent=0 // pred_region
    _
  $region13: #{critic_forward.1} parent=0 // pred_fallthru
    _
  // Predicated region
  $region14: #{critic_forward.1} parent=0 // pred_check
    _
  $region15: #{critic_forward.1} parent=0 // pred_check_branch
    %21 = sbr.rel (0) target = $region17
  $region16: #{critic_forward.1} parent=0 // pred_region
    _
  $region17: #{critic_forward.1} parent=0 // pred_fallthru
    _
  // Predicated region
  $region18: #{critic_forward.1} parent=0 // pred_check
    _
  $region19: #{critic_forward.1} parent=0 // pred_check_branch
    %23 = sbr.rel (0) target = $region21
  $region20: #{critic_forward.1} parent=0 // pred_region
    _
  $region21: #{critic_forward.1} parent=0 // pred_fallthru
    _
  // Predicated region
  $region22: #{critic_forward.1} parent=0 // pred_check
    _
  $region23: #{critic_forward.1} parent=0 // pred_check_branch
    %25 = sbr.rel (0) target = $region25
  $region24: #{critic_forward.1} parent=0 // pred_region
    _
  $region25: #{critic_forward.1} parent=0 // pred_fallthru
    _
  // Predicated region
  $region26: #{critic_forward.1} parent=0 // pred_check
    _
  $region27: #{critic_forward.1} parent=0 // pred_check_branch
    %27 = sbr.rel (0) target = $region29
  $region28: #{critic_forward.1} parent=0 // pred_region
    _
  $region29: #{critic_forward.1} parent=0 // pred_fallthru
    _
  // Predicated region
  $region30: #{critic_forward.1} parent=0 // pred_check
    _
  $region31: #{critic_forward.1} parent=0 // pred_check_branch
    %29 = sbr.rel (0) target = $region33
  $region32: #{critic_forward.1} parent=0 // pred_region
    _
  $region33: #{critic_forward.1} parent=0 // pred_fallthru
    _
  // Predicated region
  $region34: #{critic_forward.1} parent=0 // pred_check
    _
  $region35: #{critic_forward.1} parent=0 // pred_check_branch
    %31 = sbr.rel (0) target = $region37
  $region36: #{critic_forward.1} parent=0 // pred_region
    _
  $region37: #{critic_forward.1} parent=0 // pred_fallthru
    _
  %v32 = vld [vmem:[%s0] sm:$0xff]
  %v33 = vld [vmem:[%s0 + $0x8] sm:$0xff]
  %v34 = vld [vmem:[%s0 + $0x10] sm:$0xff]
  %v35 = vld [vmem:[%s0 + $0x18] sm:$0xff]
  %v36 = vld [vmem:[%s0 + $0x20] sm:$0xff]
  %v37 = vld [vmem:[%s0 + $0x28] sm:$0xff]
  %v38 = vld [vmem:[%s0 + $0x30] sm:$0xff]
  %v39 = vld [vmem:[%s0 + $0x38] sm:$0xff]
  %v40 = vld [vmem:[%s1] sm:$0xff]
  %v41 = vld [vmem:[%s1 + $0x8] sm:$0xff]
  %v42 = vld [vmem:[%s1 + $0x10] sm:$0xff]
  %v43 = vld [vmem:[%s1 + $0x18] sm:$0xff]
  %vm44 = vcmask 261120
  %v46 = vsel %vm44, %v32, 0
  %v49 = vsel %vm44, %v33, 0
  %v52 = vsel %vm44, %v34, 0
  %v55 = vsel %vm44, %v35, 0
  %v58 = vsel %vm44, %v36, 0
  %v61 = vsel %vm44, %v37, 0
  %v64 = vsel %vm44, %v38, 0
  %v67 = vsel %vm44, %v39, 0
  %69 = vmatprep.subr.mxu0 0.0
  %70 = vmatpush1.msra.mxu0 0.0
  %71 = vmatprep.subr.mxu0 0.0
  %72 = vmatpush1.msra.mxu0 0.0
  %73 = vmatprep.subr.mxu0 0.0
  %74 = vmatpush1.msra.mxu0 0.0
  %75 = vmatprep.subr.mxu0 0.0
  %76 = vmatpush1.msra.mxu0 0.0
  %77 = vmatprep.subr.mxu0 0.0
  %78 = vmatpush1.msra.mxu0 0.0
  %79 = vmatprep.subr.mxu0 0.0
  %80 = vmatpush1.msra.mxu0 0.0
  %81 = vmatprep.subr.mxu0 0.0
  %82 = vmatpush1.msra.mxu0 0.0
  %83 = vmatprep.subr.mxu0 0.0
  %84 = vmatpush1.msra.mxu0 0.0
  %85 = vmatprep.subr.mxu0 0.0
  %86 = vmatpush1.msra.mxu0 0.0
  %87 = vmatprep.subr.mxu0 0.0
  %88 = vmatpush1.msra.mxu0 0.0
  %89 = vmatprep.subr.mxu0 0.0
  %90 = vmatpush1.msra.mxu0 0.0
  %91 = vmatprep.subr.mxu0 0.0
  %92 = vmatpush1.msra.mxu0 0.0
  %93 = vmatprep.subr.mxu0 0.0
  %v94 = vand.u32 %v43, 4294901760
  %95 = vmatpush1.msra.mxu0 %v94
  %96 = vmatprep.subr.mxu0 0.0
  %v97 = vand.u32 %v42, 4294901760
  %98 = vmatpush1.msra.mxu0 %v97
  %99 = vmatprep.subr.mxu0 0.0
  %v100 = vand.u32 %v41, 4294901760
  %101 = vmatpush1.msra.mxu0 %v100
  %102 = vmatprep.subr.mxu0 0.0
  %v103 = vand.u32 %v40, 4294901760
  %104 = vmatpush1.msra.mxu0 %v103
  %105 = vmatprep.subr.mxu0 0.0
  %106 = vmatpush2.msra.mxu0 0.0
  %107 = vmatprep.subr.mxu0 0.0
  %108 = vmatpush2.msra.mxu0 0.0
  %109 = vmatprep.subr.mxu0 0.0
  %110 = vmatpush2.msra.mxu0 0.0
  %111 = vmatprep.subr.mxu0 0.0
  %112 = vmatpush2.msra.mxu0 0.0
  %113 = vmatprep.subr.mxu0 0.0
  %114 = vmatpush2.msra.mxu0 0.0
  %115 = vmatprep.subr.mxu0 0.0
  %116 = vmatpush2.msra.mxu0 0.0
  %117 = vmatprep.subr.mxu0 0.0
  %118 = vmatpush2.msra.mxu0 0.0
  %119 = vmatprep.subr.mxu0 0.0
  %120 = vmatpush2.msra.mxu0 0.0
  %121 = vmatprep.subr.mxu0 0.0
  %122 = vmatpush2.msra.mxu0 0.0
  %123 = vmatprep.subr.mxu0 0.0
  %124 = vmatpush2.msra.mxu0 0.0
  %125 = vmatprep.subr.mxu0 0.0
  %126 = vmatpush2.msra.mxu0 0.0
  %127 = vmatprep.subr.mxu0 0.0
  %128 = vmatpush2.msra.mxu0 0.0
  %129 = vmatprep.subr.mxu0 0.0
  %130 = vmatpush2.msra.mxu0 0.0
  %131 = vmatprep.subr.mxu0 0.0
  %132 = vmatpush2.msra.mxu0 0.0
  %133 = vmatprep.subr.mxu0 0.0
  %134 = vmatpush2.msra.mxu0 0.0
  %135 = vmatprep.subr.mxu0 0.0
  %136 = vmatpush2.msra.mxu0 0.0
  %137 = vmatprep.mubr.f32.mxu0 0.0
  %v138 = vand.u32 %v46, 4294901760
  %v139 = vsub.f32 %v46, %v138
  %v140 = vand.u32 %v139, 4294901760
  %v141 = vsub.f32 %v139, %v140
  %v142 = vand.u32 %v141, 4294901760
  %143 = vmatmul.mubr.f32.gmra.mxu0 %v142
  %v144 = vpop.f32.mrf.mxu0
  %v145 = vadd.f32 0.0, %v144
  %v146 = vpop.f32.mrf.mxu0
  %147 = vmatprep.mubr.f32.mxu0 0.0
  %v148 = vand.u32 %v49, 4294901760
  %v149 = vsub.f32 %v49, %v148
  %v150 = vand.u32 %v149, 4294901760
  %v151 = vsub.f32 %v149, %v150
  %v152 = vand.u32 %v151, 4294901760
  %153 = vmatmul.mubr.f32.gmra.mxu0 %v152
  %v154 = vpop.f32.mrf.mxu0
  %v155 = vadd.f32 0.0, %v154
  %v156 = vpop.f32.mrf.mxu0
  %157 = vmatprep.mubr.f32.mxu0 0.0
  %v158 = vand.u32 %v52, 4294901760
  %v159 = vsub.f32 %v52, %v158
  %v160 = vand.u32 %v159, 4294901760
  %v161 = vsub.f32 %v159, %v160
  %v162 = vand.u32 %v161, 4294901760
  %163 = vmatmul.mubr.f32.gmra.mxu0 %v162
  %v164 = vpop.f32.mrf.mxu0
  %v165 = vadd.f32 0.0, %v164
  %v166 = vpop.f32.mrf.mxu0
  %167 = vmatprep.mubr.f32.mxu0 0.0
  %v168 = vand.u32 %v55, 4294901760
  %v169 = vsub.f32 %v55, %v168
  %v170 = vand.u32 %v169, 4294901760
  %v171 = vsub.f32 %v169, %v170
  %v172 = vand.u32 %v171, 4294901760
  %173 = vmatmul.mubr.f32.gmra.mxu0 %v172
  %v174 = vpop.f32.mrf.mxu0
  %v175 = vadd.f32 0.0, %v174
  %v176 = vpop.f32.mrf.mxu0
  %177 = vmatprep.mubr.f32.mxu0 0.0
  %v178 = vand.u32 %v58, 4294901760
  %v179 = vsub.f32 %v58, %v178
  %v180 = vand.u32 %v179, 4294901760
  %v181 = vsub.f32 %v179, %v180
  %v182 = vand.u32 %v181, 4294901760
  %183 = vmatmul.mubr.f32.gmra.mxu0 %v182
  %v184 = vpop.f32.mrf.mxu0
  %v185 = vadd.f32 0.0, %v184
  %v186 = vpop.f32.mrf.mxu0
  %187 = vmatprep.mubr.f32.mxu0 0.0
  %v188 = vand.u32 %v61, 4294901760
  %v189 = vsub.f32 %v61, %v188
  %v190 = vand.u32 %v189, 4294901760
  %v191 = vsub.f32 %v189, %v190
  %v192 = vand.u32 %v191, 4294901760
  %193 = vmatmul.mubr.f32.gmra.mxu0 %v192
  %v194 = vpop.f32.mrf.mxu0
  %v195 = vadd.f32 0.0, %v194
  %v196 = vpop.f32.mrf.mxu0
  %197 = vmatprep.mubr.f32.mxu0 0.0
  %v198 = vand.u32 %v64, 4294901760
  %v199 = vsub.f32 %v64, %v198
  %v200 = vand.u32 %v199, 4294901760
  %v201 = vsub.f32 %v199, %v200
  %v202 = vand.u32 %v201, 4294901760
  %203 = vmatmul.mubr.f32.gmra.mxu0 %v202
  %v204 = vpop.f32.mrf.mxu0
  %v205 = vadd.f32 0.0, %v204
  %v206 = vpop.f32.mrf.mxu0
  %207 = vmatprep.mubr.f32.mxu0 0.0
  %v208 = vand.u32 %v67, 4294901760
  %v209 = vsub.f32 %v67, %v208
  %v210 = vand.u32 %v209, 4294901760
  %v211 = vsub.f32 %v209, %v210
  %v212 = vand.u32 %v211, 4294901760
  %213 = vmatmul.mubr.f32.gmra.mxu0 %v212
  %v214 = vpop.f32.mrf.mxu0
  %v215 = vadd.f32 0.0, %v214
  %v216 = vpop.f32.mrf.mxu0
  %217 = vdwg.mxu0
  %218 = vmatprep.subr.mxu0 0.0
  %219 = vmatpush1.msra.mxu0 0.0
  %220 = vmatprep.subr.mxu0 0.0
  %221 = vmatpush1.msra.mxu0 0.0
  %222 = vmatprep.subr.mxu0 0.0
  %223 = vmatpush1.msra.mxu0 0.0
  %224 = vmatprep.subr.mxu0 0.0
  %225 = vmatpush1.msra.mxu0 0.0
  %226 = vmatprep.subr.mxu0 0.0
  %227 = vmatpush1.msra.mxu0 0.0
  %228 = vmatprep.subr.mxu0 0.0
  %229 = vmatpush1.msra.mxu0 0.0
  %230 = vmatprep.subr.mxu0 0.0
  %231 = vmatpush1.msra.mxu0 0.0
  %232 = vmatprep.subr.mxu0 0.0
  %233 = vmatpush1.msra.mxu0 0.0
  %234 = vmatprep.subr.mxu0 0.0
  %235 = vmatpush1.msra.mxu0 0.0
  %236 = vmatprep.subr.mxu0 0.0
  %237 = vmatpush1.msra.mxu0 0.0
  %238 = vmatprep.subr.mxu0 0.0
  %239 = vmatpush1.msra.mxu0 0.0
  %240 = vmatprep.subr.mxu0 0.0
  %241 = vmatpush1.msra.mxu0 0.0
  %242 = vmatprep.subr.mxu0 0.0
  %v243 = vand.u32 %v43, 4294901760
  %v244 = vsub.f32 %v43, %v243
  %v245 = vand.u32 %v244, 4294901760
  %v246 = vsub.f32 %v244, %v245
  %v247 = vand.u32 %v246, 4294901760
  %248 = vmatpush1.msra.mxu0 %v247
  %249 = vmatprep.subr.mxu0 0.0
  %v250 = vand.u32 %v42, 4294901760
  %v251 = vsub.f32 %v42, %v250
  %v252 = vand.u32 %v251, 4294901760
  %v253 = vsub.f32 %v251, %v252
  %v254 = vand.u32 %v253, 4294901760
  %255 = vmatpush1.msra.mxu0 %v254
  %256 = vmatprep.subr.mxu0 0.0
  %v257 = vand.u32 %v41, 4294901760
  %v258 = vsub.f32 %v41, %v257
  %v259 = vand.u32 %v258, 4294901760
  %v260 = vsub.f32 %v258, %v259
  %v261 = vand.u32 %v260, 4294901760
  %262 = vmatpush1.msra.mxu0 %v261
  %263 = vmatprep.subr.mxu0 0.0
  %v264 = vand.u32 %v40, 4294901760
  %v265 = vsub.f32 %v40, %v264
  %v266 = vand.u32 %v265, 4294901760
  %v267 = vsub.f32 %v265, %v266
  %v268 = vand.u32 %v267, 4294901760
  %269 = vmatpush1.msra.mxu0 %v268
  %270 = vmatprep.subr.mxu0 0.0
  %271 = vmatpush2.msra.mxu0 0.0
  %272 = vmatprep.subr.mxu0 0.0
  %273 = vmatpush2.msra.mxu0 0.0
  %274 = vmatprep.subr.mxu0 0.0
  %275 = vmatpush2.msra.mxu0 0.0
  %276 = vmatprep.subr.mxu0 0.0
  %277 = vmatpush2.msra.mxu0 0.0
  %278 = vmatprep.subr.mxu0 0.0
  %279 = vmatpush2.msra.mxu0 0.0
  %280 = vmatprep.subr.mxu0 0.0
  %281 = vmatpush2.msra.mxu0 0.0
  %282 = vmatprep.subr.mxu0 0.0
  %283 = vmatpush2.msra.mxu0 0.0
  %284 = vmatprep.subr.mxu0 0.0
  %285 = vmatpush2.msra.mxu0 0.0
  %286 = vmatprep.subr.mxu0 0.0
  %287 = vmatpush2.msra.mxu0 0.0
  %288 = vmatprep.subr.mxu0 0.0
  %289 = vmatpush2.msra.mxu0 0.0
  %290 = vmatprep.subr.mxu0 0.0
  %291 = vmatpush2.msra.mxu0 0.0
  %292 = vmatprep.subr.mxu0 0.0
  %293 = vmatpush2.msra.mxu0 0.0
  %294 = vmatprep.subr.mxu0 0.0
  %295 = vmatpush2.msra.mxu0 0.0
  %296 = vmatprep.subr.mxu0 0.0
  %297 = vmatpush2.msra.mxu0 0.0
  %298 = vmatprep.subr.mxu0 0.0
  %299 = vmatpush2.msra.mxu0 0.0
  %300 = vmatprep.subr.mxu0 0.0
  %301 = vmatpush2.msra.mxu0 0.0
  %302 = vmatprep.mubr.f32.mxu0 0.0
  %v303 = vand.u32 %v46, 4294901760
  %304 = vmatmul.mubr.f32.gmra.mxu0 %v303
  %v305 = vpop.f32.mrf.mxu0
  %v306 = vadd.f32 %v145, %v305
  %v307 = vpop.f32.mrf.mxu0
  %308 = vmatprep.mubr.f32.mxu0 0.0
  %v309 = vand.u32 %v49, 4294901760
  %310 = vmatmul.mubr.f32.gmra.mxu0 %v309
  %v311 = vpop.f32.mrf.mxu0
  %v312 = vadd.f32 %v155, %v311
  %v313 = vpop.f32.mrf.mxu0
  %314 = vmatprep.mubr.f32.mxu0 0.0
  %v315 = vand.u32 %v52, 4294901760
  %316 = vmatmul.mubr.f32.gmra.mxu0 %v315
  %v317 = vpop.f32.mrf.mxu0
  %v318 = vadd.f32 %v165, %v317
  %v319 = vpop.f32.mrf.mxu0
  %320 = vmatprep.mubr.f32.mxu0 0.0
  %v321 = vand.u32 %v55, 4294901760
  %322 = vmatmul.mubr.f32.gmra.mxu0 %v321
  %v323 = vpop.f32.mrf.mxu0
  %v324 = vadd.f32 %v175, %v323
  %v325 = vpop.f32.mrf.mxu0
  %326 = vmatprep.mubr.f32.mxu0 0.0
  %v327 = vand.u32 %v58, 4294901760
  %328 = vmatmul.mubr.f32.gmra.mxu0 %v327
  %v329 = vpop.f32.mrf.mxu0
  %v330 = vadd.f32 %v185, %v329
  %v331 = vpop.f32.mrf.mxu0
  %332 = vmatprep.mubr.f32.mxu0 0.0
  %v333 = vand.u32 %v61, 4294901760
  %334 = vmatmul.mubr.f32.gmra.mxu0 %v333
  %v335 = vpop.f32.mrf.mxu0
  %v336 = vadd.f32 %v195, %v335
  %v337 = vpop.f32.mrf.mxu0
  %338 = vmatprep.mubr.f32.mxu0 0.0
  %v339 = vand.u32 %v64, 4294901760
  %340 = vmatmul.mubr.f32.gmra.mxu0 %v339
  %v341 = vpop.f32.mrf.mxu0
  %v342 = vadd.f32 %v205, %v341
  %v343 = vpop.f32.mrf.mxu0
  %344 = vmatprep.mubr.f32.mxu0 0.0
  %v345 = vand.u32 %v67, 4294901760
  %346 = vmatmul.mubr.f32.gmra.mxu0 %v345
  %v347 = vpop.f32.mrf.mxu0
  %v348 = vadd.f32 %v215, %v347
  %v349 = vpop.f32.mrf.mxu0
  %350 = vdwg.mxu0
  %351 = vmatprep.subr.mxu0 0.0
  %352 = vmatpush1.msra.mxu0 0.0
  %353 = vmatprep.subr.mxu0 0.0
  %354 = vmatpush1.msra.mxu0 0.0
  %355 = vmatprep.subr.mxu0 0.0
  %356 = vmatpush1.msra.mxu0 0.0
  %357 = vmatprep.subr.mxu0 0.0
  %358 = vmatpush1.msra.mxu0 0.0
  %359 = vmatprep.subr.mxu0 0.0
  %360 = vmatpush1.msra.mxu0 0.0
  %361 = vmatprep.subr.mxu0 0.0
  %362 = vmatpush1.msra.mxu0 0.0
  %363 = vmatprep.subr.mxu0 0.0
  %364 = vmatpush1.msra.mxu0 0.0
  %365 = vmatprep.subr.mxu0 0.0
  %366 = vmatpush1.msra.mxu0 0.0
  %367 = vmatprep.subr.mxu0 0.0
  %368 = vmatpush1.msra.mxu0 0.0
  %369 = vmatprep.subr.mxu0 0.0
  %370 = vmatpush1.msra.mxu0 0.0
  %371 = vmatprep.subr.mxu0 0.0
  %372 = vmatpush1.msra.mxu0 0.0
  %373 = vmatprep.subr.mxu0 0.0
  %374 = vmatpush1.msra.mxu0 0.0
  %375 = vmatprep.subr.mxu0 0.0
  %v376 = vand.u32 %v43, 4294901760
  %v377 = vsub.f32 %v43, %v376
  %378 = vmatpush1.msra.mxu0 %v377
  %379 = vmatprep.subr.mxu0 0.0
  %v380 = vand.u32 %v42, 4294901760
  %v381 = vsub.f32 %v42, %v380
  %382 = vmatpush1.msra.mxu0 %v381
  %383 = vmatprep.subr.mxu0 0.0
  %v384 = vand.u32 %v41, 4294901760
  %v385 = vsub.f32 %v41, %v384
  %386 = vmatpush1.msra.mxu0 %v385
  %387 = vmatprep.subr.mxu0 0.0
  %v388 = vand.u32 %v40, 4294901760
  %v389 = vsub.f32 %v40, %v388
  %390 = vmatpush1.msra.mxu0 %v389
  %391 = vmatprep.subr.mxu0 0.0
  %392 = vmatpush2.msra.mxu0 0.0
  %393 = vmatprep.subr.mxu0 0.0
  %394 = vmatpush2.msra.mxu0 0.0
  %395 = vmatprep.subr.mxu0 0.0
  %396 = vmatpush2.msra.mxu0 0.0
  %397 = vmatprep.subr.mxu0 0.0
  %398 = vmatpush2.msra.mxu0 0.0
  %399 = vmatprep.subr.mxu0 0.0
  %400 = vmatpush2.msra.mxu0 0.0
  %401 = vmatprep.subr.mxu0 0.0
  %402 = vmatpush2.msra.mxu0 0.0
  %403 = vmatprep.subr.mxu0 0.0
  %404 = vmatpush2.msra.mxu0 0.0
  %405 = vmatprep.subr.mxu0 0.0
  %406 = vmatpush2.msra.mxu0 0.0
  %407 = vmatprep.subr.mxu0 0.0
  %408 = vmatpush2.msra.mxu0 0.0
  %409 = vmatprep.subr.mxu0 0.0
  %410 = vmatpush2.msra.mxu0 0.0
  %411 = vmatprep.subr.mxu0 0.0
  %412 = vmatpush2.msra.mxu0 0.0
  %413 = vmatprep.subr.mxu0 0.0
  %414 = vmatpush2.msra.mxu0 0.0
  %415 = vmatprep.subr.mxu0 0.0
  %416 = vmatpush2.msra.mxu0 0.0
  %417 = vmatprep.subr.mxu0 0.0
  %418 = vmatpush2.msra.mxu0 0.0
  %419 = vmatprep.subr.mxu0 0.0
  %420 = vmatpush2.msra.mxu0 0.0
  %421 = vmatprep.subr.mxu0 0.0
  %422 = vmatpush2.msra.mxu0 0.0
  %423 = vmatprep.mubr.f32.mxu0 0.0
  %v424 = vand.u32 %v46, 4294901760
  %v425 = vsub.f32 %v46, %v424
  %426 = vmatmul.mubr.f32.gmra.mxu0 %v425
  %v427 = vpop.f32.mrf.mxu0
  %v428 = vadd.f32 %v306, %v427
  %v429 = vpop.f32.mrf.mxu0
  %430 = vmatprep.mubr.f32.mxu0 0.0
  %v431 = vand.u32 %v49, 4294901760
  %v432 = vsub.f32 %v49, %v431
  %433 = vmatmul.mubr.f32.gmra.mxu0 %v432
  %v434 = vpop.f32.mrf.mxu0
  %v435 = vadd.f32 %v312, %v434
  %v436 = vpop.f32.mrf.mxu0
  %437 = vmatprep.mubr.f32.mxu0 0.0
  %v438 = vand.u32 %v52, 4294901760
  %v439 = vsub.f32 %v52, %v438
  %440 = vmatmul.mubr.f32.gmra.mxu0 %v439
  %v441 = vpop.f32.mrf.mxu0
  %v442 = vadd.f32 %v318, %v441
  %v443 = vpop.f32.mrf.mxu0
  %444 = vmatprep.mubr.f32.mxu0 0.0
  %v445 = vand.u32 %v55, 4294901760
  %v446 = vsub.f32 %v55, %v445
  %447 = vmatmul.mubr.f32.gmra.mxu0 %v446
  %v448 = vpop.f32.mrf.mxu0
  %v449 = vadd.f32 %v324, %v448
  %v450 = vpop.f32.mrf.mxu0
  %451 = vmatprep.mubr.f32.mxu0 0.0
  %v452 = vand.u32 %v58, 4294901760
  %v453 = vsub.f32 %v58, %v452
  %454 = vmatmul.mubr.f32.gmra.mxu0 %v453
  %v455 = vpop.f32.mrf.mxu0
  %v456 = vadd.f32 %v330, %v455
  %v457 = vpop.f32.mrf.mxu0
  %458 = vmatprep.mubr.f32.mxu0 0.0
  %v459 = vand.u32 %v61, 4294901760
  %v460 = vsub.f32 %v61, %v459
  %461 = vmatmul.mubr.f32.gmra.mxu0 %v460
  %v462 = vpop.f32.mrf.mxu0
  %v463 = vadd.f32 %v336, %v462
  %v464 = vpop.f32.mrf.mxu0
  %465 = vmatprep.mubr.f32.mxu0 0.0
  %v466 = vand.u32 %v64, 4294901760
  %v467 = vsub.f32 %v64, %v466
  %468 = vmatmul.mubr.f32.gmra.mxu0 %v467
  %v469 = vpop.f32.mrf.mxu0
  %v470 = vadd.f32 %v342, %v469
  %v471 = vpop.f32.mrf.mxu0
  %472 = vmatprep.mubr.f32.mxu0 0.0
  %v473 = vand.u32 %v67, 4294901760
  %v474 = vsub.f32 %v67, %v473
  %475 = vmatmul.mubr.f32.gmra.mxu0 %v474
  %v476 = vpop.f32.mrf.mxu0
  %v477 = vadd.f32 %v348, %v476
  %v478 = vpop.f32.mrf.mxu0
  %479 = vdwg.mxu0
  %480 = vmatprep.subr.mxu0 0.0
  %481 = vmatpush1.msra.mxu0 0.0
  %482 = vmatprep.subr.mxu0 0.0
  %483 = vmatpush1.msra.mxu0 0.0
  %484 = vmatprep.subr.mxu0 0.0
  %485 = vmatpush1.msra.mxu0 0.0
  %486 = vmatprep.subr.mxu0 0.0
  %487 = vmatpush1.msra.mxu0 0.0
  %488 = vmatprep.subr.mxu0 0.0
  %489 = vmatpush1.msra.mxu0 0.0
  %490 = vmatprep.subr.mxu0 0.0
  %491 = vmatpush1.msra.mxu0 0.0
  %492 = vmatprep.subr.mxu0 0.0
  %493 = vmatpush1.msra.mxu0 0.0
  %494 = vmatprep.subr.mxu0 0.0
  %495 = vmatpush1.msra.mxu0 0.0
  %496 = vmatprep.subr.mxu0 0.0
  %497 = vmatpush1.msra.mxu0 0.0
  %498 = vmatprep.subr.mxu0 0.0
  %499 = vmatpush1.msra.mxu0 0.0
  %500 = vmatprep.subr.mxu0 0.0
  %501 = vmatpush1.msra.mxu0 0.0
  %502 = vmatprep.subr.mxu0 0.0
  %503 = vmatpush1.msra.mxu0 0.0
  %504 = vmatprep.subr.mxu0 0.0
  %v505 = vand.u32 %v43, 4294901760
  %506 = vmatpush1.msra.mxu0 %v505
  %507 = vmatprep.subr.mxu0 0.0
  %v508 = vand.u32 %v42, 4294901760
  %509 = vmatpush1.msra.mxu0 %v508
  %510 = vmatprep.subr.mxu0 0.0
  %v511 = vand.u32 %v41, 4294901760
  %512 = vmatpush1.msra.mxu0 %v511
  %513 = vmatprep.subr.mxu0 0.0
  %v514 = vand.u32 %v40, 4294901760
  %515 = vmatpush1.msra.mxu0 %v514
  %516 = vmatprep.subr.mxu0 0.0
  %517 = vmatpush2.msra.mxu0 0.0
  %518 = vmatprep.subr.mxu0 0.0
  %519 = vmatpush2.msra.mxu0 0.0
  %520 = vmatprep.subr.mxu0 0.0
  %521 = vmatpush2.msra.mxu0 0.0
  %522 = vmatprep.subr.mxu0 0.0
  %523 = vmatpush2.msra.mxu0 0.0
  %524 = vmatprep.subr.mxu0 0.0
  %525 = vmatpush2.msra.mxu0 0.0
  %526 = vmatprep.subr.mxu0 0.0
  %527 = vmatpush2.msra.mxu0 0.0
  %528 = vmatprep.subr.mxu0 0.0
  %529 = vmatpush2.msra.mxu0 0.0
  %530 = vmatprep.subr.mxu0 0.0
  %531 = vmatpush2.msra.mxu0 0.0
  %532 = vmatprep.subr.mxu0 0.0
  %533 = vmatpush2.msra.mxu0 0.0
  %534 = vmatprep.subr.mxu0 0.0
  %535 = vmatpush2.msra.mxu0 0.0
  %536 = vmatprep.subr.mxu0 0.0
  %537 = vmatpush2.msra.mxu0 0.0
  %538 = vmatprep.subr.mxu0 0.0
  %539 = vmatpush2.msra.mxu0 0.0
  %540 = vmatprep.subr.mxu0 0.0
  %541 = vmatpush2.msra.mxu0 0.0
  %542 = vmatprep.subr.mxu0 0.0
  %543 = vmatpush2.msra.mxu0 0.0
  %544 = vmatprep.subr.mxu0 0.0
  %545 = vmatpush2.msra.mxu0 0.0
  %546 = vmatprep.subr.mxu0 0.0
  %547 = vmatpush2.msra.mxu0 0.0
  %548 = vmatprep.mubr.f32.mxu0 0.0
  %v549 = vand.u32 %v46, 4294901760
  %v550 = vsub.f32 %v46, %v549
  %v551 = vand.u32 %v550, 4294901760
  %552 = vmatmul.mubr.f32.gmra.mxu0 %v551
  %v553 = vpop.f32.mrf.mxu0
  %v554 = vadd.f32 %v428, %v553
  %v555 = vpop.f32.mrf.mxu0
  %556 = vmatprep.mubr.f32.mxu0 0.0
  %v557 = vand.u32 %v49, 4294901760
  %v558 = vsub.f32 %v49, %v557
  %v559 = vand.u32 %v558, 4294901760
  %560 = vmatmul.mubr.f32.gmra.mxu0 %v559
  %v561 = vpop.f32.mrf.mxu0
  %v562 = vadd.f32 %v435, %v561
  %v563 = vpop.f32.mrf.mxu0
  %564 = vmatprep.mubr.f32.mxu0 0.0
  %v565 = vand.u32 %v52, 4294901760
  %v566 = vsub.f32 %v52, %v565
  %v567 = vand.u32 %v566, 4294901760
  %568 = vmatmul.mubr.f32.gmra.mxu0 %v567
  %v569 = vpop.f32.mrf.mxu0
  %v570 = vadd.f32 %v442, %v569
  %v571 = vpop.f32.mrf.mxu0
  %572 = vmatprep.mubr.f32.mxu0 0.0
  %v573 = vand.u32 %v55, 4294901760
  %v574 = vsub.f32 %v55, %v573
  %v575 = vand.u32 %v574, 4294901760
  %576 = vmatmul.mubr.f32.gmra.mxu0 %v575
  %v577 = vpop.f32.mrf.mxu0
  %v578 = vadd.f32 %v449, %v577
  %v579 = vpop.f32.mrf.mxu0
  %580 = vmatprep.mubr.f32.mxu0 0.0
  %v581 = vand.u32 %v58, 4294901760
  %v582 = vsub.f32 %v58, %v581
  %v583 = vand.u32 %v582, 4294901760
  %584 = vmatmul.mubr.f32.gmra.mxu0 %v583
  %v585 = vpop.f32.mrf.mxu0
  %v586 = vadd.f32 %v456, %v585
  %v587 = vpop.f32.mrf.mxu0
  %588 = vmatprep.mubr.f32.mxu0 0.0
  %v589 = vand.u32 %v61, 4294901760
  %v590 = vsub.f32 %v61, %v589
  %v591 = vand.u32 %v590, 4294901760
  %592 = vmatmul.mubr.f32.gmra.mxu0 %v591
  %v593 = vpop.f32.mrf.mxu0
  %v594 = vadd.f32 %v463, %v593
  %v595 = vpop.f32.mrf.mxu0
  %596 = vmatprep.mubr.f32.mxu0 0.0
  %v597 = vand.u32 %v64, 4294901760
  %v598 = vsub.f32 %v64, %v597
  %v599 = vand.u32 %v598, 4294901760
  %600 = vmatmul.mubr.f32.gmra.mxu0 %v599
  %v601 = vpop.f32.mrf.mxu0
  %v602 = vadd.f32 %v470, %v601
  %v603 = vpop.f32.mrf.mxu0
  %604 = vmatprep.mubr.f32.mxu0 0.0
  %v605 = vand.u32 %v67, 4294901760
  %v606 = vsub.f32 %v67, %v605
  %v607 = vand.u32 %v606, 4294901760
  %608 = vmatmul.mubr.f32.gmra.mxu0 %v607
  %v609 = vpop.f32.mrf.mxu0
  %v610 = vadd.f32 %v477, %v609
  %v611 = vpop.f32.mrf.mxu0
  %612 = vdwg.mxu0
  %613 = vmatprep.subr.mxu0 0.0
  %614 = vmatpush1.msra.mxu0 0.0
  %615 = vmatprep.subr.mxu0 0.0
  %616 = vmatpush1.msra.mxu0 0.0
  %617 = vmatprep.subr.mxu0 0.0
  %618 = vmatpush1.msra.mxu0 0.0
  %619 = vmatprep.subr.mxu0 0.0
  %620 = vmatpush1.msra.mxu0 0.0
  %621 = vmatprep.subr.mxu0 0.0
  %622 = vmatpush1.msra.mxu0 0.0
  %623 = vmatprep.subr.mxu0 0.0
  %624 = vmatpush1.msra.mxu0 0.0
  %625 = vmatprep.subr.mxu0 0.0
  %626 = vmatpush1.msra.mxu0 0.0
  %627 = vmatprep.subr.mxu0 0.0
  %628 = vmatpush1.msra.mxu0 0.0
  %629 = vmatprep.subr.mxu0 0.0
  %630 = vmatpush1.msra.mxu0 0.0
  %631 = vmatprep.subr.mxu0 0.0
  %632 = vmatpush1.msra.mxu0 0.0
  %633 = vmatprep.subr.mxu0 0.0
  %634 = vmatpush1.msra.mxu0 0.0
  %635 = vmatprep.subr.mxu0 0.0
  %636 = vmatpush1.msra.mxu0 0.0
  %637 = vmatprep.subr.mxu0 0.0
  %v638 = vand.u32 %v43, 4294901760
  %v639 = vsub.f32 %v43, %v638
  %v640 = vand.u32 %v639, 4294901760
  %641 = vmatpush1.msra.mxu0 %v640
  %642 = vmatprep.subr.mxu0 0.0
  %v643 = vand.u32 %v42, 4294901760
  %v644 = vsub.f32 %v42, %v643
  %v645 = vand.u32 %v644, 4294901760
  %646 = vmatpush1.msra.mxu0 %v645
  %647 = vmatprep.subr.mxu0 0.0
  %v648 = vand.u32 %v41, 4294901760
  %v649 = vsub.f32 %v41, %v648
  %v650 = vand.u32 %v649, 4294901760
  %651 = vmatpush1.msra.mxu0 %v650
  %652 = vmatprep.subr.mxu0 0.0
  %v653 = vand.u32 %v40, 4294901760
  %v654 = vsub.f32 %v40, %v653
  %v655 = vand.u32 %v654, 4294901760
  %656 = vmatpush1.msra.mxu0 %v655
  %657 = vmatprep.subr.mxu0 0.0
  %658 = vmatpush2.msra.mxu0 0.0
  %659 = vmatprep.subr.mxu0 0.0
  %660 = vmatpush2.msra.mxu0 0.0
  %661 = vmatprep.subr.mxu0 0.0
  %662 = vmatpush2.msra.mxu0 0.0
  %663 = vmatprep.subr.mxu0 0.0
  %664 = vmatpush2.msra.mxu0 0.0
  %665 = vmatprep.subr.mxu0 0.0
  %666 = vmatpush2.msra.mxu0 0.0
  %667 = vmatprep.subr.mxu0 0.0
  %668 = vmatpush2.msra.mxu0 0.0
  %669 = vmatprep.subr.mxu0 0.0
  %670 = vmatpush2.msra.mxu0 0.0
  %671 = vmatprep.subr.mxu0 0.0
  %672 = vmatpush2.msra.mxu0 0.0
  %673 = vmatprep.subr.mxu0 0.0
  %674 = vmatpush2.msra.mxu0 0.0
  %675 = vmatprep.subr.mxu0 0.0
  %676 = vmatpush2.msra.mxu0 0.0
  %677 = vmatprep.subr.mxu0 0.0
  %678 = vmatpush2.msra.mxu0 0.0
  %679 = vmatprep.subr.mxu0 0.0
  %680 = vmatpush2.msra.mxu0 0.0
  %681 = vmatprep.subr.mxu0 0.0
  %682 = vmatpush2.msra.mxu0 0.0
  %683 = vmatprep.subr.mxu0 0.0
  %684 = vmatpush2.msra.mxu0 0.0
  %685 = vmatprep.subr.mxu0 0.0
  %686 = vmatpush2.msra.mxu0 0.0
  %687 = vmatprep.subr.mxu0 0.0
  %688 = vmatpush2.msra.mxu0 0.0
  %689 = vmatprep.mubr.f32.mxu0 0.0
  %v690 = vand.u32 %v46, 4294901760
  %691 = vmatmul.mubr.f32.gmra.mxu0 %v690
  %v692 = vpop.f32.mrf.mxu0
  %v693 = vadd.f32 %v554, %v692
  %v694 = vpop.f32.mrf.mxu0
  %695 = vmatprep.mubr.f32.mxu0 0.0
  %v696 = vand.u32 %v49, 4294901760
  %697 = vmatmul.mubr.f32.gmra.mxu0 %v696
  %v698 = vpop.f32.mrf.mxu0
  %v699 = vadd.f32 %v562, %v698
  %v700 = vpop.f32.mrf.mxu0
  %701 = vmatprep.mubr.f32.mxu0 0.0
  %v702 = vand.u32 %v52, 4294901760
  %703 = vmatmul.mubr.f32.gmra.mxu0 %v702
  %v704 = vpop.f32.mrf.mxu0
  %v705 = vadd.f32 %v570, %v704
  %v706 = vpop.f32.mrf.mxu0
  %707 = vmatprep.mubr.f32.mxu0 0.0
  %v708 = vand.u32 %v55, 4294901760
  %709 = vmatmul.mubr.f32.gmra.mxu0 %v708
  %v710 = vpop.f32.mrf.mxu0
  %v711 = vadd.f32 %v578, %v710
  %v712 = vpop.f32.mrf.mxu0
  %713 = vmatprep.mubr.f32.mxu0 0.0
  %v714 = vand.u32 %v58, 4294901760
  %715 = vmatmul.mubr.f32.gmra.mxu0 %v714
  %v716 = vpop.f32.mrf.mxu0
  %v717 = vadd.f32 %v586, %v716
  %v718 = vpop.f32.mrf.mxu0
  %719 = vmatprep.mubr.f32.mxu0 0.0
  %v720 = vand.u32 %v61, 4294901760
  %721 = vmatmul.mubr.f32.gmra.mxu0 %v720
  %v722 = vpop.f32.mrf.mxu0
  %v723 = vadd.f32 %v594, %v722
  %v724 = vpop.f32.mrf.mxu0
  %725 = vmatprep.mubr.f32.mxu0 0.0
  %v726 = vand.u32 %v64, 4294901760
  %727 = vmatmul.mubr.f32.gmra.mxu0 %v726
  %v728 = vpop.f32.mrf.mxu0
  %v729 = vadd.f32 %v602, %v728
  %v730 = vpop.f32.mrf.mxu0
  %731 = vmatprep.mubr.f32.mxu0 0.0
  %v732 = vand.u32 %v67, 4294901760
  %733 = vmatmul.mubr.f32.gmra.mxu0 %v732
  %v734 = vpop.f32.mrf.mxu0
  %v735 = vadd.f32 %v610, %v734
  %v736 = vpop.f32.mrf.mxu0
  %737 = vdwg.mxu0
  %738 = vmatprep.subr.mxu0 0.0
  %739 = vmatpush1.msra.mxu0 0.0
  %740 = vmatprep.subr.mxu0 0.0
  %741 = vmatpush1.msra.mxu0 0.0
  %742 = vmatprep.subr.mxu0 0.0
  %743 = vmatpush1.msra.mxu0 0.0
  %744 = vmatprep.subr.mxu0 0.0
  %745 = vmatpush1.msra.mxu0 0.0
  %746 = vmatprep.subr.mxu0 0.0
  %747 = vmatpush1.msra.mxu0 0.0
  %748 = vmatprep.subr.mxu0 0.0
  %749 = vmatpush1.msra.mxu0 0.0
  %750 = vmatprep.subr.mxu0 0.0
  %751 = vmatpush1.msra.mxu0 0.0
  %752 = vmatprep.subr.mxu0 0.0
  %753 = vmatpush1.msra.mxu0 0.0
  %754 = vmatprep.subr.mxu0 0.0
  %755 = vmatpush1.msra.mxu0 0.0
  %756 = vmatprep.subr.mxu0 0.0
  %757 = vmatpush1.msra.mxu0 0.0
  %758 = vmatprep.subr.mxu0 0.0
  %759 = vmatpush1.msra.mxu0 0.0
  %760 = vmatprep.subr.mxu0 0.0
  %761 = vmatpush1.msra.mxu0 0.0
  %762 = vmatprep.subr.mxu0 0.0
  %v763 = vand.u32 %v43, 4294901760
  %764 = vmatpush1.msra.mxu0 %v763
  %765 = vmatprep.subr.mxu0 0.0
  %v766 = vand.u32 %v42, 4294901760
  %767 = vmatpush1.msra.mxu0 %v766
  %768 = vmatprep.subr.mxu0 0.0
  %v769 = vand.u32 %v41, 4294901760
  %770 = vmatpush1.msra.mxu0 %v769
  %771 = vmatprep.subr.mxu0 0.0
  %v772 = vand.u32 %v40, 4294901760
  %773 = vmatpush1.msra.mxu0 %v772
  %774 = vmatprep.subr.mxu0 0.0
  %775 = vmatpush2.msra.mxu0 0.0
  %776 = vmatprep.subr.mxu0 0.0
  %777 = vmatpush2.msra.mxu0 0.0
  %778 = vmatprep.subr.mxu0 0.0
  %779 = vmatpush2.msra.mxu0 0.0
  %780 = vmatprep.subr.mxu0 0.0
  %781 = vmatpush2.msra.mxu0 0.0
  %782 = vmatprep.subr.mxu0 0.0
  %783 = vmatpush2.msra.mxu0 0.0
  %784 = vmatprep.subr.mxu0 0.0
  %785 = vmatpush2.msra.mxu0 0.0
  %786 = vmatprep.subr.mxu0 0.0
  %787 = vmatpush2.msra.mxu0 0.0
  %788 = vmatprep.subr.mxu0 0.0
  %789 = vmatpush2.msra.mxu0 0.0
  %790 = vmatprep.subr.mxu0 0.0
  %791 = vmatpush2.msra.mxu0 0.0
  %792 = vmatprep.subr.mxu0 0.0
  %793 = vmatpush2.msra.mxu0 0.0
  %794 = vmatprep.subr.mxu0 0.0
  %795 = vmatpush2.msra.mxu0 0.0
  %796 = vmatprep.subr.mxu0 0.0
  %797 = vmatpush2.msra.mxu0 0.0
  %798 = vmatprep.subr.mxu0 0.0
  %799 = vmatpush2.msra.mxu0 0.0
  %800 = vmatprep.subr.mxu0 0.0
  %801 = vmatpush2.msra.mxu0 0.0
  %802 = vmatprep.subr.mxu0 0.0
  %803 = vmatpush2.msra.mxu0 0.0
  %804 = vmatprep.subr.mxu0 0.0
  %805 = vmatpush2.msra.mxu0 0.0
  %806 = vmatprep.mubr.f32.mxu0 0.0
  %v807 = vand.u32 %v46, 4294901760
  %808 = vmatmul.mubr.f32.gmra.mxu0 %v807
  %v809 = vpop.f32.mrf.mxu0
  %v810 = vadd.f32 %v693, %v809
  %v811 = vpop.f32.mrf.mxu0
  %812 = vmatprep.mubr.f32.mxu0 0.0
  %v813 = vand.u32 %v49, 4294901760
  %814 = vmatmul.mubr.f32.gmra.mxu0 %v813
  %v815 = vpop.f32.mrf.mxu0
  %v816 = vadd.f32 %v699, %v815
  %v817 = vpop.f32.mrf.mxu0
  %818 = vmatprep.mubr.f32.mxu0 0.0
  %v819 = vand.u32 %v52, 4294901760
  %820 = vmatmul.mubr.f32.gmra.mxu0 %v819
  %v821 = vpop.f32.mrf.mxu0
  %v822 = vadd.f32 %v705, %v821
  %v823 = vpop.f32.mrf.mxu0
  %824 = vmatprep.mubr.f32.mxu0 0.0
  %v825 = vand.u32 %v55, 4294901760
  %826 = vmatmul.mubr.f32.gmra.mxu0 %v825
  %v827 = vpop.f32.mrf.mxu0
  %v828 = vadd.f32 %v711, %v827
  %v829 = vpop.f32.mrf.mxu0
  %830 = vmatprep.mubr.f32.mxu0 0.0
  %v831 = vand.u32 %v58, 4294901760
  %832 = vmatmul.mubr.f32.gmra.mxu0 %v831
  %v833 = vpop.f32.mrf.mxu0
  %v834 = vadd.f32 %v717, %v833
  %v835 = vpop.f32.mrf.mxu0
  %836 = vmatprep.mubr.f32.mxu0 0.0
  %v837 = vand.u32 %v61, 4294901760
  %838 = vmatmul.mubr.f32.gmra.mxu0 %v837
  %v839 = vpop.f32.mrf.mxu0
  %v840 = vadd.f32 %v723, %v839
  %v841 = vpop.f32.mrf.mxu0
  %842 = vmatprep.mubr.f32.mxu0 0.0
  %v843 = vand.u32 %v64, 4294901760
  %844 = vmatmul.mubr.f32.gmra.mxu0 %v843
  %v845 = vpop.f32.mrf.mxu0
  %v846 = vadd.f32 %v729, %v845
  %v847 = vpop.f32.mrf.mxu0
  %848 = vmatprep.mubr.f32.mxu0 0.0
  %v849 = vand.u32 %v67, 4294901760
  %850 = vmatmul.mubr.f32.gmra.mxu0 %v849
  %v851 = vpop.f32.mrf.mxu0
  %v852 = vadd.f32 %v735, %v851
  %v853 = vpop.f32.mrf.mxu0
  %854 = vdwg.mxu0
  %v855 = vsel %vm44, %v810, 0.0
  %v856 = vrot.slane %v855, 4
  %v857 = vadd.f32 %v855, %v856
  %v858 = vrot.slane %v857, 2
  %v859 = vadd.f32 %v857, %v858
  %v860 = vrot.slane %v859, 1
  %v861 = vadd.f32 %v859, %v860
  %v862 = vsel %vm44, %v816, 0.0
  %v863 = vrot.slane %v862, 4
  %v864 = vadd.f32 %v862, %v863
  %v865 = vrot.slane %v864, 2
  %v866 = vadd.f32 %v864, %v865
  %v867 = vrot.slane %v866, 1
  %v868 = vadd.f32 %v866, %v867
  %v869 = vsel %vm44, %v822, 0.0
  %v870 = vrot.slane %v869, 4
  %v871 = vadd.f32 %v869, %v870
  %v872 = vrot.slane %v871, 2
  %v873 = vadd.f32 %v871, %v872
  %v874 = vrot.slane %v873, 1
  %v875 = vadd.f32 %v873, %v874
  %v876 = vsel %vm44, %v828, 0.0
  %v877 = vrot.slane %v876, 4
  %v878 = vadd.f32 %v876, %v877
  %v879 = vrot.slane %v878, 2
  %v880 = vadd.f32 %v878, %v879
  %v881 = vrot.slane %v880, 1
  %v882 = vadd.f32 %v880, %v881
  %v883 = vsel %vm44, %v834, 0.0
  %v884 = vrot.slane %v883, 4
  %v885 = vadd.f32 %v883, %v884
  %v886 = vrot.slane %v885, 2
  %v887 = vadd.f32 %v885, %v886
  %v888 = vrot.slane %v887, 1
  %v889 = vadd.f32 %v887, %v888
  %v890 = vsel %vm44, %v840, 0.0
  %v891 = vrot.slane %v890, 4
  %v892 = vadd.f32 %v890, %v891
  %v893 = vrot.slane %v892, 2
  %v894 = vadd.f32 %v892, %v893
  %v895 = vrot.slane %v894, 1
  %v896 = vadd.f32 %v894, %v895
  %v897 = vsel %vm44, %v846, 0.0
  %v898 = vrot.slane %v897, 4
  %v899 = vadd.f32 %v897, %v898
  %v900 = vrot.slane %v899, 2
  %v901 = vadd.f32 %v899, %v900
  %v902 = vrot.slane %v901, 1
  %v903 = vadd.f32 %v901, %v902
  %v904 = vsel %vm44, %v852, 0.0
  %v905 = vrot.slane %v904, 4
  %v906 = vadd.f32 %v904, %v905
  %v907 = vrot.slane %v906, 2
  %v908 = vadd.f32 %v906, %v907
  %v909 = vrot.slane %v908, 1
  %v910 = vadd.f32 %v908, %v909
  %v911 = vmul.f32 %v861, 0.125
  %v912 = vmul.f32 %v868, 0.125
  %v913 = vmul.f32 %v875, 0.125
  %v914 = vmul.f32 %v882, 0.125
  %v915 = vmul.f32 %v889, 0.125
  %v916 = vmul.f32 %v896, 0.125
  %v917 = vmul.f32 %v903, 0.125
  %v918 = vmul.f32 %v910, 0.125
  %v919 = vsel %vm44, %v810, -inf
  %v920 = vrot.slane %v919, 4
  %v921 = vmax.f32 %v919, %v920
  %v922 = vrot.slane %v921, 2
  %v923 = vmax.f32 %v921, %v922
  %v924 = vrot.slane %v923, 1
  %v925 = vmax.f32 %v923, %v924
  %v926 = vsel %vm44, %v816, -inf
  %v927 = vrot.slane %v926, 4
  %v928 = vmax.f32 %v926, %v927
  %v929 = vrot.slane %v928, 2
  %v930 = vmax.f32 %v928, %v929
  %v931 = vrot.slane %v930, 1
  %v932 = vmax.f32 %v930, %v931
  %v933 = vsel %vm44, %v822, -inf
  %v934 = vrot.slane %v933, 4
  %v935 = vmax.f32 %v933, %v934
  %v936 = vrot.slane %v935, 2
  %v937 = vmax.f32 %v935, %v936
  %v938 = vrot.slane %v937, 1
  %v939 = vmax.f32 %v937, %v938
  %v940 = vsel %vm44, %v828, -inf
  %v941 = vrot.slane %v940, 4
  %v942 = vmax.f32 %v940, %v941
  %v943 = vrot.slane %v942, 2
  %v944 = vmax.f32 %v942, %v943
  %v945 = vrot.slane %v944, 1
  %v946 = vmax.f32 %v944, %v945
  %v947 = vsel %vm44, %v834, -inf
  %v948 = vrot.slane %v947, 4
  %v949 = vmax.f32 %v947, %v948
  %v950 = vrot.slane %v949, 2
  %v951 = vmax.f32 %v949, %v950
  %v952 = vrot.slane %v951, 1
  %v953 = vmax.f32 %v951, %v952
  %v954 = vsel %vm44, %v840, -inf
  %v955 = vrot.slane %v954, 4
  %v956 = vmax.f32 %v954, %v955
  %v957 = vrot.slane %v956, 2
  %v958 = vmax.f32 %v956, %v957
  %v959 = vrot.slane %v958, 1
  %v960 = vmax.f32 %v958, %v959
  %v961 = vsel %vm44, %v846, -inf
  %v962 = vrot.slane %v961, 4
  %v963 = vmax.f32 %v961, %v962
  %v964 = vrot.slane %v963, 2
  %v965 = vmax.f32 %v963, %v964
  %v966 = vrot.slane %v965, 1
  %v967 = vmax.f32 %v965, %v966
  %v968 = vsel %vm44, %v852, -inf
  %v969 = vrot.slane %v968, 4
  %v970 = vmax.f32 %v968, %v969
  %v971 = vrot.slane %v970, 2
  %v972 = vmax.f32 %v970, %v971
  %v973 = vrot.slane %v972, 1
  %v974 = vmax.f32 %v972, %v973
  %v975 = vld [vmem:[%s2] sm:$0xff]
  %v976 = vld [vmem:[%s2 + $0x8] sm:$0xff]
  %v977 = vld [vmem:[%s2 + $0x10] sm:$0xff]
  %v978 = vld [vmem:[%s2 + $0x18] sm:$0xff]
  %v979 = vld [vmem:[%s3] sm:$0xff]
  %v980 = vld [vmem:[%s3 + $0x8] sm:$0xff]
  %v981 = vld [vmem:[%s3 + $0x10] sm:$0xff]
  %v982 = vld [vmem:[%s3 + $0x18] sm:$0xff]
  %vm991 = vcmask 1041409
  %v992 = vsel %vm991, %v932, %v925
  %vm993 = vcmask 1042434
  %v994 = vsel %vm993, %v939, %v992
  %vm995 = vcmask 1043459
  %v996 = vsel %vm995, %v946, %v994
  %vm997 = vcmask 1044484
  %v998 = vsel %vm997, %v953, %v996
  %vm999 = vcmask 1045509
  %v1000 = vsel %vm999, %v960, %v998
  %vm1001 = vcmask 1046534
  %v1002 = vsel %vm1001, %v967, %v1000
  %vm1003 = vcmask 1047559
  %v1004 = vsel %vm1003, %v974, %v1002
  %v1005 = vsel %vm44, %v1004, 0
  %1007 = vmatprep.subr.mxu0 0.0
  %1008 = vmatpush1.msra.mxu0 0.0
  %1009 = vmatprep.subr.mxu0 0.0
  %1010 = vmatpush1.msra.mxu0 0.0
  %1011 = vmatprep.subr.mxu0 0.0
  %1012 = vmatpush1.msra.mxu0 0.0
  %1013 = vmatprep.subr.mxu0 0.0
  %1014 = vmatpush1.msra.mxu0 0.0
  %1015 = vmatprep.subr.mxu0 0.0
  %1016 = vmatpush1.msra.mxu0 0.0
  %1017 = vmatprep.subr.mxu0 0.0
  %1018 = vmatpush1.msra.mxu0 0.0
  %1019 = vmatprep.subr.mxu0 0.0
  %1020 = vmatpush1.msra.mxu0 0.0
  %1021 = vmatprep.subr.mxu0 0.0
  %1022 = vmatpush1.msra.mxu0 0.0
  %1023 = vmatprep.subr.mxu0 0.0
  %1024 = vmatpush1.msra.mxu0 0.0
  %1025 = vmatprep.subr.mxu0 0.0
  %1026 = vmatpush1.msra.mxu0 0.0
  %1027 = vmatprep.subr.mxu0 0.0
  %1028 = vmatpush1.msra.mxu0 0.0
  %1029 = vmatprep.subr.mxu0 0.0
  %1030 = vmatpush1.msra.mxu0 0.0
  %1031 = vmatprep.subr.mxu0 0.0
  %v1032 = vand.u32 %v982, 4294901760
  %1033 = vmatpush1.msra.mxu0 %v1032
  %1034 = vmatprep.subr.mxu0 0.0
  %v1035 = vand.u32 %v981, 4294901760
  %1036 = vmatpush1.msra.mxu0 %v1035
  %1037 = vmatprep.subr.mxu0 0.0
  %v1038 = vand.u32 %v980, 4294901760
  %1039 = vmatpush1.msra.mxu0 %v1038
  %1040 = vmatprep.subr.mxu0 0.0
  %v1041 = vand.u32 %v979, 4294901760
  %1042 = vmatpush1.msra.mxu0 %v1041
  %1043 = vmatprep.subr.mxu0 0.0
  %1044 = vmatpush2.msra.mxu0 0.0
  %1045 = vmatprep.subr.mxu0 0.0
  %1046 = vmatpush2.msra.mxu0 0.0
  %1047 = vmatprep.subr.mxu0 0.0
  %1048 = vmatpush2.msra.mxu0 0.0
  %1049 = vmatprep.subr.mxu0 0.0
  %1050 = vmatpush2.msra.mxu0 0.0
  %1051 = vmatprep.subr.mxu0 0.0
  %1052 = vmatpush2.msra.mxu0 0.0
  %1053 = vmatprep.subr.mxu0 0.0
  %1054 = vmatpush2.msra.mxu0 0.0
  %1055 = vmatprep.subr.mxu0 0.0
  %1056 = vmatpush2.msra.mxu0 0.0
  %1057 = vmatprep.subr.mxu0 0.0
  %1058 = vmatpush2.msra.mxu0 0.0
  %1059 = vmatprep.subr.mxu0 0.0
  %1060 = vmatpush2.msra.mxu0 0.0
  %1061 = vmatprep.subr.mxu0 0.0
  %1062 = vmatpush2.msra.mxu0 0.0
  %1063 = vmatprep.subr.mxu0 0.0
  %1064 = vmatpush2.msra.mxu0 0.0
  %1065 = vmatprep.subr.mxu0 0.0
  %1066 = vmatpush2.msra.mxu0 0.0
  %1067 = vmatprep.subr.mxu0 0.0
  %1068 = vmatpush2.msra.mxu0 0.0
  %1069 = vmatprep.subr.mxu0 0.0
  %1070 = vmatpush2.msra.mxu0 0.0
  %1071 = vmatprep.subr.mxu0 0.0
  %1072 = vmatpush2.msra.mxu0 0.0
  %1073 = vmatprep.subr.mxu0 0.0
  %1074 = vmatpush2.msra.mxu0 0.0
  %1075 = vmatprep.mubr.f32.mxu0 0.0
  %v1076 = vand.u32 %v1005, 4294901760
  %v1077 = vsub.f32 %v1005, %v1076
  %v1078 = vand.u32 %v1077, 4294901760
  %v1079 = vsub.f32 %v1077, %v1078
  %v1080 = vand.u32 %v1079, 4294901760
  %1081 = vmatmul.mubr.f32.gmra.mxu0 %v1080
  %v1082 = vpop.f32.mrf.mxu0
  %v1083 = vadd.f32 0.0, %v1082
  %v1084 = vpop.f32.mrf.mxu0
  %1085 = vdwg.mxu0
  %1086 = vmatprep.subr.mxu0 0.0
  %1087 = vmatpush1.msra.mxu0 0.0
  %1088 = vmatprep.subr.mxu0 0.0
  %1089 = vmatpush1.msra.mxu0 0.0
  %1090 = vmatprep.subr.mxu0 0.0
  %1091 = vmatpush1.msra.mxu0 0.0
  %1092 = vmatprep.subr.mxu0 0.0
  %1093 = vmatpush1.msra.mxu0 0.0
  %1094 = vmatprep.subr.mxu0 0.0
  %1095 = vmatpush1.msra.mxu0 0.0
  %1096 = vmatprep.subr.mxu0 0.0
  %1097 = vmatpush1.msra.mxu0 0.0
  %1098 = vmatprep.subr.mxu0 0.0
  %1099 = vmatpush1.msra.mxu0 0.0
  %1100 = vmatprep.subr.mxu0 0.0
  %1101 = vmatpush1.msra.mxu0 0.0
  %1102 = vmatprep.subr.mxu0 0.0
  %1103 = vmatpush1.msra.mxu0 0.0
  %1104 = vmatprep.subr.mxu0 0.0
  %1105 = vmatpush1.msra.mxu0 0.0
  %1106 = vmatprep.subr.mxu0 0.0
  %1107 = vmatpush1.msra.mxu0 0.0
  %1108 = vmatprep.subr.mxu0 0.0
  %1109 = vmatpush1.msra.mxu0 0.0
  %1110 = vmatprep.subr.mxu0 0.0
  %v1111 = vand.u32 %v982, 4294901760
  %v1112 = vsub.f32 %v982, %v1111
  %v1113 = vand.u32 %v1112, 4294901760
  %v1114 = vsub.f32 %v1112, %v1113
  %v1115 = vand.u32 %v1114, 4294901760
  %1116 = vmatpush1.msra.mxu0 %v1115
  %1117 = vmatprep.subr.mxu0 0.0
  %v1118 = vand.u32 %v981, 4294901760
  %v1119 = vsub.f32 %v981, %v1118
  %v1120 = vand.u32 %v1119, 4294901760
  %v1121 = vsub.f32 %v1119, %v1120
  %v1122 = vand.u32 %v1121, 4294901760
  %1123 = vmatpush1.msra.mxu0 %v1122
  %1124 = vmatprep.subr.mxu0 0.0
  %v1125 = vand.u32 %v980, 4294901760
  %v1126 = vsub.f32 %v980, %v1125
  %v1127 = vand.u32 %v1126, 4294901760
  %v1128 = vsub.f32 %v1126, %v1127
  %v1129 = vand.u32 %v1128, 4294901760
  %1130 = vmatpush1.msra.mxu0 %v1129
  %1131 = vmatprep.subr.mxu0 0.0
  %v1132 = vand.u32 %v979, 4294901760
  %v1133 = vsub.f32 %v979, %v1132
  %v1134 = vand.u32 %v1133, 4294901760
  %v1135 = vsub.f32 %v1133, %v1134
  %v1136 = vand.u32 %v1135, 4294901760
  %1137 = vmatpush1.msra.mxu0 %v1136
  %1138 = vmatprep.subr.mxu0 0.0
  %1139 = vmatpush2.msra.mxu0 0.0
  %1140 = vmatprep.subr.mxu0 0.0
  %1141 = vmatpush2.msra.mxu0 0.0
  %1142 = vmatprep.subr.mxu0 0.0
  %1143 = vmatpush2.msra.mxu0 0.0
  %1144 = vmatprep.subr.mxu0 0.0
  %1145 = vmatpush2.msra.mxu0 0.0
  %1146 = vmatprep.subr.mxu0 0.0
  %1147 = vmatpush2.msra.mxu0 0.0
  %1148 = vmatprep.subr.mxu0 0.0
  %1149 = vmatpush2.msra.mxu0 0.0
  %1150 = vmatprep.subr.mxu0 0.0
  %1151 = vmatpush2.msra.mxu0 0.0
  %1152 = vmatprep.subr.mxu0 0.0
  %1153 = vmatpush2.msra.mxu0 0.0
  %1154 = vmatprep.subr.mxu0 0.0
  %1155 = vmatpush2.msra.mxu0 0.0
  %1156 = vmatprep.subr.mxu0 0.0
  %1157 = vmatpush2.msra.mxu0 0.0
  %1158 = vmatprep.subr.mxu0 0.0
  %1159 = vmatpush2.msra.mxu0 0.0
  %1160 = vmatprep.subr.mxu0 0.0
  %1161 = vmatpush2.msra.mxu0 0.0
  %1162 = vmatprep.subr.mxu0 0.0
  %1163 = vmatpush2.msra.mxu0 0.0
  %1164 = vmatprep.subr.mxu0 0.0
  %1165 = vmatpush2.msra.mxu0 0.0
  %1166 = vmatprep.subr.mxu0 0.0
  %1167 = vmatpush2.msra.mxu0 0.0
  %1168 = vmatprep.subr.mxu0 0.0
  %1169 = vmatpush2.msra.mxu0 0.0
  %1170 = vmatprep.mubr.f32.mxu0 0.0
  %v1171 = vand.u32 %v1005, 4294901760
  %1172 = vmatmul.mubr.f32.gmra.mxu0 %v1171
  %v1173 = vpop.f32.mrf.mxu0
  %v1174 = vadd.f32 %v1083, %v1173
  %v1175 = vpop.f32.mrf.mxu0
  %1176 = vdwg.mxu0
  %1177 = vmatprep.subr.mxu0 0.0
  %1178 = vmatpush1.msra.mxu0 0.0
  %1179 = vmatprep.subr.mxu0 0.0
  %1180 = vmatpush1.msra.mxu0 0.0
  %1181 = vmatprep.subr.mxu0 0.0
  %1182 = vmatpush1.msra.mxu0 0.0
  %1183 = vmatprep.subr.mxu0 0.0
  %1184 = vmatpush1.msra.mxu0 0.0
  %1185 = vmatprep.subr.mxu0 0.0
  %1186 = vmatpush1.msra.mxu0 0.0
  %1187 = vmatprep.subr.mxu0 0.0
  %1188 = vmatpush1.msra.mxu0 0.0
  %1189 = vmatprep.subr.mxu0 0.0
  %1190 = vmatpush1.msra.mxu0 0.0
  %1191 = vmatprep.subr.mxu0 0.0
  %1192 = vmatpush1.msra.mxu0 0.0
  %1193 = vmatprep.subr.mxu0 0.0
  %1194 = vmatpush1.msra.mxu0 0.0
  %1195 = vmatprep.subr.mxu0 0.0
  %1196 = vmatpush1.msra.mxu0 0.0
  %1197 = vmatprep.subr.mxu0 0.0
  %1198 = vmatpush1.msra.mxu0 0.0
  %1199 = vmatprep.subr.mxu0 0.0
  %1200 = vmatpush1.msra.mxu0 0.0
  %1201 = vmatprep.subr.mxu0 0.0
  %v1202 = vand.u32 %v982, 4294901760
  %v1203 = vsub.f32 %v982, %v1202
  %1204 = vmatpush1.msra.mxu0 %v1203
  %1205 = vmatprep.subr.mxu0 0.0
  %v1206 = vand.u32 %v981, 4294901760
  %v1207 = vsub.f32 %v981, %v1206
  %1208 = vmatpush1.msra.mxu0 %v1207
  %1209 = vmatprep.subr.mxu0 0.0
  %v1210 = vand.u32 %v980, 4294901760
  %v1211 = vsub.f32 %v980, %v1210
  %1212 = vmatpush1.msra.mxu0 %v1211
  %1213 = vmatprep.subr.mxu0 0.0
  %v1214 = vand.u32 %v979, 4294901760
  %v1215 = vsub.f32 %v979, %v1214
  %1216 = vmatpush1.msra.mxu0 %v1215
  %1217 = vmatprep.subr.mxu0 0.0
  %1218 = vmatpush2.msra.mxu0 0.0
  %1219 = vmatprep.subr.mxu0 0.0
  %1220 = vmatpush2.msra.mxu0 0.0
  %1221 = vmatprep.subr.mxu0 0.0
  %1222 = vmatpush2.msra.mxu0 0.0
  %1223 = vmatprep.subr.mxu0 0.0
  %1224 = vmatpush2.msra.mxu0 0.0
  %1225 = vmatprep.subr.mxu0 0.0
  %1226 = vmatpush2.msra.mxu0 0.0
  %1227 = vmatprep.subr.mxu0 0.0
  %1228 = vmatpush2.msra.mxu0 0.0
  %1229 = vmatprep.subr.mxu0 0.0
  %1230 = vmatpush2.msra.mxu0 0.0
  %1231 = vmatprep.subr.mxu0 0.0
  %1232 = vmatpush2.msra.mxu0 0.0
  %1233 = vmatprep.subr.mxu0 0.0
  %1234 = vmatpush2.msra.mxu0 0.0
  %1235 = vmatprep.subr.mxu0 0.0
  %1236 = vmatpush2.msra.mxu0 0.0
  %1237 = vmatprep.subr.mxu0 0.0
  %1238 = vmatpush2.msra.mxu0 0.0
  %1239 = vmatprep.subr.mxu0 0.0
  %1240 = vmatpush2.msra.mxu0 0.0
  %1241 = vmatprep.subr.mxu0 0.0
  %1242 = vmatpush2.msra.mxu0 0.0
  %1243 = vmatprep.subr.mxu0 0.0
  %1244 = vmatpush2.msra.mxu0 0.0
  %1245 = vmatprep.subr.mxu0 0.0
  %1246 = vmatpush2.msra.mxu0 0.0
  %1247 = vmatprep.subr.mxu0 0.0
  %1248 = vmatpush2.msra.mxu0 0.0
  %1249 = vmatprep.mubr.f32.mxu0 0.0
  %v1250 = vand.u32 %v1005, 4294901760
  %v1251 = vsub.f32 %v1005, %v1250
  %1252 = vmatmul.mubr.f32.gmra.mxu0 %v1251
  %v1253 = vpop.f32.mrf.mxu0
  %v1254 = vadd.f32 %v1174, %v1253
  %v1255 = vpop.f32.mrf.mxu0
  %1256 = vdwg.mxu0
  %1257 = vmatprep.subr.mxu0 0.0
  %1258 = vmatpush1.msra.mxu0 0.0
  %1259 = vmatprep.subr.mxu0 0.0
  %1260 = vmatpush1.msra.mxu0 0.0
  %1261 = vmatprep.subr.mxu0 0.0
  %1262 = vmatpush1.msra.mxu0 0.0
  %1263 = vmatprep.subr.mxu0 0.0
  %1264 = vmatpush1.msra.mxu0 0.0
  %1265 = vmatprep.subr.mxu0 0.0
  %1266 = vmatpush1.msra.mxu0 0.0
  %1267 = vmatprep.subr.mxu0 0.0
  %1268 = vmatpush1.msra.mxu0 0.0
  %1269 = vmatprep.subr.mxu0 0.0
  %1270 = vmatpush1.msra.mxu0 0.0
  %1271 = vmatprep.subr.mxu0 0.0
  %1272 = vmatpush1.msra.mxu0 0.0
  %1273 = vmatprep.subr.mxu0 0.0
  %1274 = vmatpush1.msra.mxu0 0.0
  %1275 = vmatprep.subr.mxu0 0.0
  %1276 = vmatpush1.msra.mxu0 0.0
  %1277 = vmatprep.subr.mxu0 0.0
  %1278 = vmatpush1.msra.mxu0 0.0
  %1279 = vmatprep.subr.mxu0 0.0
  %1280 = vmatpush1.msra.mxu0 0.0
  %1281 = vmatprep.subr.mxu0 0.0
  %v1282 = vand.u32 %v982, 4294901760
  %1283 = vmatpush1.msra.mxu0 %v1282
  %1284 = vmatprep.subr.mxu0 0.0
  %v1285 = vand.u32 %v981, 4294901760
  %1286 = vmatpush1.msra.mxu0 %v1285
  %1287 = vmatprep.subr.mxu0 0.0
  %v1288 = vand.u32 %v980, 4294901760
  %1289 = vmatpush1.msra.mxu0 %v1288
  %1290 = vmatprep.subr.mxu0 0.0
  %v1291 = vand.u32 %v979, 4294901760
  %1292 = vmatpush1.msra.mxu0 %v1291
  %1293 = vmatprep.subr.mxu0 0.0
  %1294 = vmatpush2.msra.mxu0 0.0
  %1295 = vmatprep.subr.mxu0 0.0
  %1296 = vmatpush2.msra.mxu0 0.0
  %1297 = vmatprep.subr.mxu0 0.0
  %1298 = vmatpush2.msra.mxu0 0.0
  %1299 = vmatprep.subr.mxu0 0.0
  %1300 = vmatpush2.msra.mxu0 0.0
  %1301 = vmatprep.subr.mxu0 0.0
  %1302 = vmatpush2.msra.mxu0 0.0
  %1303 = vmatprep.subr.mxu0 0.0
  %1304 = vmatpush2.msra.mxu0 0.0
  %1305 = vmatprep.subr.mxu0 0.0
  %1306 = vmatpush2.msra.mxu0 0.0
  %1307 = vmatprep.subr.mxu0 0.0
  %1308 = vmatpush2.msra.mxu0 0.0
  %1309 = vmatprep.subr.mxu0 0.0
  %1310 = vmatpush2.msra.mxu0 0.0
  %1311 = vmatprep.subr.mxu0 0.0
  %1312 = vmatpush2.msra.mxu0 0.0
  %1313 = vmatprep.subr.mxu0 0.0
  %1314 = vmatpush2.msra.mxu0 0.0
  %1315 = vmatprep.subr.mxu0 0.0
  %1316 = vmatpush2.msra.mxu0 0.0
  %1317 = vmatprep.subr.mxu0 0.0
  %1318 = vmatpush2.msra.mxu0 0.0
  %1319 = vmatprep.subr.mxu0 0.0
  %1320 = vmatpush2.msra.mxu0 0.0
  %1321 = vmatprep.subr.mxu0 0.0
  %1322 = vmatpush2.msra.mxu0 0.0
  %1323 = vmatprep.subr.mxu0 0.0
  %1324 = vmatpush2.msra.mxu0 0.0
  %1325 = vmatprep.mubr.f32.mxu0 0.0
  %v1326 = vand.u32 %v1005, 4294901760
  %v1327 = vsub.f32 %v1005, %v1326
  %v1328 = vand.u32 %v1327, 4294901760
  %1329 = vmatmul.mubr.f32.gmra.mxu0 %v1328
  %v1330 = vpop.f32.mrf.mxu0
  %v1331 = vadd.f32 %v1254, %v1330
  %v1332 = vpop.f32.mrf.mxu0
  %1333 = vdwg.mxu0
  %1334 = vmatprep.subr.mxu0 0.0
  %1335 = vmatpush1.msra.mxu0 0.0
  %1336 = vmatprep.subr.mxu0 0.0
  %1337 = vmatpush1.msra.mxu0 0.0
  %1338 = vmatprep.subr.mxu0 0.0
  %1339 = vmatpush1.msra.mxu0 0.0
  %1340 = vmatprep.subr.mxu0 0.0
  %1341 = vmatpush1.msra.mxu0 0.0
  %1342 = vmatprep.subr.mxu0 0.0
  %1343 = vmatpush1.msra.mxu0 0.0
  %1344 = vmatprep.subr.mxu0 0.0
  %1345 = vmatpush1.msra.mxu0 0.0
  %1346 = vmatprep.subr.mxu0 0.0
  %1347 = vmatpush1.msra.mxu0 0.0
  %1348 = vmatprep.subr.mxu0 0.0
  %1349 = vmatpush1.msra.mxu0 0.0
  %1350 = vmatprep.subr.mxu0 0.0
  %1351 = vmatpush1.msra.mxu0 0.0
  %1352 = vmatprep.subr.mxu0 0.0
  %1353 = vmatpush1.msra.mxu0 0.0
  %1354 = vmatprep.subr.mxu0 0.0
  %1355 = vmatpush1.msra.mxu0 0.0
  %1356 = vmatprep.subr.mxu0 0.0
  %1357 = vmatpush1.msra.mxu0 0.0
  %1358 = vmatprep.subr.mxu0 0.0
  %v1359 = vand.u32 %v982, 4294901760
  %v1360 = vsub.f32 %v982, %v1359
  %v1361 = vand.u32 %v1360, 4294901760
  %1362 = vmatpush1.msra.mxu0 %v1361
  %1363 = vmatprep.subr.mxu0 0.0
  %v1364 = vand.u32 %v981, 4294901760
  %v1365 = vsub.f32 %v981, %v1364
  %v1366 = vand.u32 %v1365, 4294901760
  %1367 = vmatpush1.msra.mxu0 %v1366
  %1368 = vmatprep.subr.mxu0 0.0
  %v1369 = vand.u32 %v980, 4294901760
  %v1370 = vsub.f32 %v980, %v1369
  %v1371 = vand.u32 %v1370, 4294901760
  %1372 = vmatpush1.msra.mxu0 %v1371
  %1373 = vmatprep.subr.mxu0 0.0
  %v1374 = vand.u32 %v979, 4294901760
  %v1375 = vsub.f32 %v979, %v1374
  %v1376 = vand.u32 %v1375, 4294901760
  %1377 = vmatpush1.msra.mxu0 %v1376
  %1378 = vmatprep.subr.mxu0 0.0
  %1379 = vmatpush2.msra.mxu0 0.0
  %1380 = vmatprep.subr.mxu0 0.0
  %1381 = vmatpush2.msra.mxu0 0.0
  %1382 = vmatprep.subr.mxu0 0.0
  %1383 = vmatpush2.msra.mxu0 0.0
  %1384 = vmatprep.subr.mxu0 0.0
  %1385 = vmatpush2.msra.mxu0 0.0
  %1386 = vmatprep.subr.mxu0 0.0
  %1387 = vmatpush2.msra.mxu0 0.0
  %1388 = vmatprep.subr.mxu0 0.0
  %1389 = vmatpush2.msra.mxu0 0.0
  %1390 = vmatprep.subr.mxu0 0.0
  %1391 = vmatpush2.msra.mxu0 0.0
  %1392 = vmatprep.subr.mxu0 0.0
  %1393 = vmatpush2.msra.mxu0 0.0
  %1394 = vmatprep.subr.mxu0 0.0
  %1395 = vmatpush2.msra.mxu0 0.0
  %1396 = vmatprep.subr.mxu0 0.0
  %1397 = vmatpush2.msra.mxu0 0.0
  %1398 = vmatprep.subr.mxu0 0.0
  %1399 = vmatpush2.msra.mxu0 0.0
  %1400 = vmatprep.subr.mxu0 0.0
  %1401 = vmatpush2.msra.mxu0 0.0
  %1402 = vmatprep.subr.mxu0 0.0
  %1403 = vmatpush2.msra.mxu0 0.0
  %1404 = vmatprep.subr.mxu0 0.0
  %1405 = vmatpush2.msra.mxu0 0.0
  %1406 = vmatprep.subr.mxu0 0.0
  %1407 = vmatpush2.msra.mxu0 0.0
  %1408 = vmatprep.subr.mxu0 0.0
  %1409 = vmatpush2.msra.mxu0 0.0
  %1410 = vmatprep.mubr.f32.mxu0 0.0
  %v1411 = vand.u32 %v1005, 4294901760
  %1412 = vmatmul.mubr.f32.gmra.mxu0 %v1411
  %v1413 = vpop.f32.mrf.mxu0
  %v1414 = vadd.f32 %v1331, %v1413
  %v1415 = vpop.f32.mrf.mxu0
  %1416 = vdwg.mxu0
  %1417 = vmatprep.subr.mxu0 0.0
  %1418 = vmatpush1.msra.mxu0 0.0
  %1419 = vmatprep.subr.mxu0 0.0
  %1420 = vmatpush1.msra.mxu0 0.0
  %1421 = vmatprep.subr.mxu0 0.0
  %1422 = vmatpush1.msra.mxu0 0.0
  %1423 = vmatprep.subr.mxu0 0.0
  %1424 = vmatpush1.msra.mxu0 0.0
  %1425 = vmatprep.subr.mxu0 0.0
  %1426 = vmatpush1.msra.mxu0 0.0
  %1427 = vmatprep.subr.mxu0 0.0
  %1428 = vmatpush1.msra.mxu0 0.0
  %1429 = vmatprep.subr.mxu0 0.0
  %1430 = vmatpush1.msra.mxu0 0.0
  %1431 = vmatprep.subr.mxu0 0.0
  %1432 = vmatpush1.msra.mxu0 0.0
  %1433 = vmatprep.subr.mxu0 0.0
  %1434 = vmatpush1.msra.mxu0 0.0
  %1435 = vmatprep.subr.mxu0 0.0
  %1436 = vmatpush1.msra.mxu0 0.0
  %1437 = vmatprep.subr.mxu0 0.0
  %1438 = vmatpush1.msra.mxu0 0.0
  %1439 = vmatprep.subr.mxu0 0.0
  %1440 = vmatpush1.msra.mxu0 0.0
  %1441 = vmatprep.subr.mxu0 0.0
  %v1442 = vand.u32 %v982, 4294901760
  %1443 = vmatpush1.msra.mxu0 %v1442
  %1444 = vmatprep.subr.mxu0 0.0
  %v1445 = vand.u32 %v981, 4294901760
  %1446 = vmatpush1.msra.mxu0 %v1445
  %1447 = vmatprep.subr.mxu0 0.0
  %v1448 = vand.u32 %v980, 4294901760
  %1449 = vmatpush1.msra.mxu0 %v1448
  %1450 = vmatprep.subr.mxu0 0.0
  %v1451 = vand.u32 %v979, 4294901760
  %1452 = vmatpush1.msra.mxu0 %v1451
  %1453 = vmatprep.subr.mxu0 0.0
  %1454 = vmatpush2.msra.mxu0 0.0
  %1455 = vmatprep.subr.mxu0 0.0
  %1456 = vmatpush2.msra.mxu0 0.0
  %1457 = vmatprep.subr.mxu0 0.0
  %1458 = vmatpush2.msra.mxu0 0.0
  %1459 = vmatprep.subr.mxu0 0.0
  %1460 = vmatpush2.msra.mxu0 0.0
  %1461 = vmatprep.subr.mxu0 0.0
  %1462 = vmatpush2.msra.mxu0 0.0
  %1463 = vmatprep.subr.mxu0 0.0
  %1464 = vmatpush2.msra.mxu0 0.0
  %1465 = vmatprep.subr.mxu0 0.0
  %1466 = vmatpush2.msra.mxu0 0.0
  %1467 = vmatprep.subr.mxu0 0.0
  %1468 = vmatpush2.msra.mxu0 0.0
  %1469 = vmatprep.subr.mxu0 0.0
  %1470 = vmatpush2.msra.mxu0 0.0
  %1471 = vmatprep.subr.mxu0 0.0
  %1472 = vmatpush2.msra.mxu0 0.0
  %1473 = vmatprep.subr.mxu0 0.0
  %1474 = vmatpush2.msra.mxu0 0.0
  %1475 = vmatprep.subr.mxu0 0.0
  %1476 = vmatpush2.msra.mxu0 0.0
  %1477 = vmatprep.subr.mxu0 0.0
  %1478 = vmatpush2.msra.mxu0 0.0
  %1479 = vmatprep.subr.mxu0 0.0
  %1480 = vmatpush2.msra.mxu0 0.0
  %1481 = vmatprep.subr.mxu0 0.0
  %1482 = vmatpush2.msra.mxu0 0.0
  %1483 = vmatprep.subr.mxu0 0.0
  %1484 = vmatpush2.msra.mxu0 0.0
  %1485 = vmatprep.mubr.f32.mxu0 0.0
  %v1486 = vand.u32 %v1005, 4294901760
  %1487 = vmatmul.mubr.f32.gmra.mxu0 %v1486
  %v1488 = vpop.f32.mrf.mxu0
  %v1489 = vadd.f32 %v1414, %v1488
  %v1490 = vpop.f32.mrf.mxu0
  %1491 = vdwg.mxu0
  %v1500 = vsel %vm991, %v912, %v911
  %v1501 = vsel %vm993, %v913, %v1500
  %v1502 = vsel %vm995, %v914, %v1501
  %v1503 = vsel %vm997, %v915, %v1502
  %v1504 = vsel %vm999, %v916, %v1503
  %v1505 = vsel %vm1001, %v917, %v1504
  %v1506 = vsel %vm1003, %v918, %v1505
  %v1507 = vsel %vm44, %v1506, 0
  %1509 = vmatprep.subr.mxu0 0.0
  %1510 = vmatpush1.msra.mxu0 0.0
  %1511 = vmatprep.subr.mxu0 0.0
  %1512 = vmatpush1.msra.mxu0 0.0
  %1513 = vmatprep.subr.mxu0 0.0
  %1514 = vmatpush1.msra.mxu0 0.0
  %1515 = vmatprep.subr.mxu0 0.0
  %1516 = vmatpush1.msra.mxu0 0.0
  %1517 = vmatprep.subr.mxu0 0.0
  %1518 = vmatpush1.msra.mxu0 0.0
  %1519 = vmatprep.subr.mxu0 0.0
  %1520 = vmatpush1.msra.mxu0 0.0
  %1521 = vmatprep.subr.mxu0 0.0
  %1522 = vmatpush1.msra.mxu0 0.0
  %1523 = vmatprep.subr.mxu0 0.0
  %1524 = vmatpush1.msra.mxu0 0.0
  %1525 = vmatprep.subr.mxu0 0.0
  %1526 = vmatpush1.msra.mxu0 0.0
  %1527 = vmatprep.subr.mxu0 0.0
  %1528 = vmatpush1.msra.mxu0 0.0
  %1529 = vmatprep.subr.mxu0 0.0
  %1530 = vmatpush1.msra.mxu0 0.0
  %1531 = vmatprep.subr.mxu0 0.0
  %1532 = vmatpush1.msra.mxu0 0.0
  %1533 = vmatprep.subr.mxu0 0.0
  %v1534 = vand.u32 %v978, 4294901760
  %1535 = vmatpush1.msra.mxu0 %v1534
  %1536 = vmatprep.subr.mxu0 0.0
  %v1537 = vand.u32 %v977, 4294901760
  %1538 = vmatpush1.msra.mxu0 %v1537
  %1539 = vmatprep.subr.mxu0 0.0
  %v1540 = vand.u32 %v976, 4294901760
  %1541 = vmatpush1.msra.mxu0 %v1540
  %1542 = vmatprep.subr.mxu0 0.0
  %v1543 = vand.u32 %v975, 4294901760
  %1544 = vmatpush1.msra.mxu0 %v1543
  %1545 = vmatprep.subr.mxu0 0.0
  %1546 = vmatpush2.msra.mxu0 0.0
  %1547 = vmatprep.subr.mxu0 0.0
  %1548 = vmatpush2.msra.mxu0 0.0
  %1549 = vmatprep.subr.mxu0 0.0
  %1550 = vmatpush2.msra.mxu0 0.0
  %1551 = vmatprep.subr.mxu0 0.0
  %1552 = vmatpush2.msra.mxu0 0.0
  %1553 = vmatprep.subr.mxu0 0.0
  %1554 = vmatpush2.msra.mxu0 0.0
  %1555 = vmatprep.subr.mxu0 0.0
  %1556 = vmatpush2.msra.mxu0 0.0
  %1557 = vmatprep.subr.mxu0 0.0
  %1558 = vmatpush2.msra.mxu0 0.0
  %1559 = vmatprep.subr.mxu0 0.0
  %1560 = vmatpush2.msra.mxu0 0.0
  %1561 = vmatprep.subr.mxu0 0.0
  %1562 = vmatpush2.msra.mxu0 0.0
  %1563 = vmatprep.subr.mxu0 0.0
  %1564 = vmatpush2.msra.mxu0 0.0
  %1565 = vmatprep.subr.mxu0 0.0
  %1566 = vmatpush2.msra.mxu0 0.0
  %1567 = vmatprep.subr.mxu0 0.0
  %1568 = vmatpush2.msra.mxu0 0.0
  %1569 = vmatprep.subr.mxu0 0.0
  %1570 = vmatpush2.msra.mxu0 0.0
  %1571 = vmatprep.subr.mxu0 0.0
  %1572 = vmatpush2.msra.mxu0 0.0
  %1573 = vmatprep.subr.mxu0 0.0
  %1574 = vmatpush2.msra.mxu0 0.0
  %1575 = vmatprep.subr.mxu0 0.0
  %1576 = vmatpush2.msra.mxu0 0.0
  %1577 = vmatprep.mubr.f32.mxu0 0.0
  %v1578 = vand.u32 %v1507, 4294901760
  %v1579 = vsub.f32 %v1507, %v1578
  %v1580 = vand.u32 %v1579, 4294901760
  %v1581 = vsub.f32 %v1579, %v1580
  %v1582 = vand.u32 %v1581, 4294901760
  %1583 = vmatmul.mubr.f32.gmra.mxu0 %v1582
  %v1584 = vpop.f32.mrf.mxu0
  %v1585 = vadd.f32 %v1489, %v1584
  %v1586 = vpop.f32.mrf.mxu0
  %1587 = vdwg.mxu0
  %1588 = vmatprep.subr.mxu0 0.0
  %1589 = vmatpush1.msra.mxu0 0.0
  %1590 = vmatprep.subr.mxu0 0.0
  %1591 = vmatpush1.msra.mxu0 0.0
  %1592 = vmatprep.subr.mxu0 0.0
  %1593 = vmatpush1.msra.mxu0 0.0
  %1594 = vmatprep.subr.mxu0 0.0
  %1595 = vmatpush1.msra.mxu0 0.0
  %1596 = vmatprep.subr.mxu0 0.0
  %1597 = vmatpush1.msra.mxu0 0.0
  %1598 = vmatprep.subr.mxu0 0.0
  %1599 = vmatpush1.msra.mxu0 0.0
  %1600 = vmatprep.subr.mxu0 0.0
  %1601 = vmatpush1.msra.mxu0 0.0
  %1602 = vmatprep.subr.mxu0 0.0
  %1603 = vmatpush1.msra.mxu0 0.0
  %1604 = vmatprep.subr.mxu0 0.0
  %1605 = vmatpush1.msra.mxu0 0.0
  %1606 = vmatprep.subr.mxu0 0.0
  %1607 = vmatpush1.msra.mxu0 0.0
  %1608 = vmatprep.subr.mxu0 0.0
  %1609 = vmatpush1.msra.mxu0 0.0
  %1610 = vmatprep.subr.mxu0 0.0
  %1611 = vmatpush1.msra.mxu0 0.0
  %1612 = vmatprep.subr.mxu0 0.0
  %v1613 = vand.u32 %v978, 4294901760
  %v1614 = vsub.f32 %v978, %v1613
  %v1615 = vand.u32 %v1614, 4294901760
  %v1616 = vsub.f32 %v1614, %v1615
  %v1617 = vand.u32 %v1616, 4294901760
  %1618 = vmatpush1.msra.mxu0 %v1617
  %1619 = vmatprep.subr.mxu0 0.0
  %v1620 = vand.u32 %v977, 4294901760
  %v1621 = vsub.f32 %v977, %v1620
  %v1622 = vand.u32 %v1621, 4294901760
  %v1623 = vsub.f32 %v1621, %v1622
  %v1624 = vand.u32 %v1623, 4294901760
  %1625 = vmatpush1.msra.mxu0 %v1624
  %1626 = vmatprep.subr.mxu0 0.0
  %v1627 = vand.u32 %v976, 4294901760
  %v1628 = vsub.f32 %v976, %v1627
  %v1629 = vand.u32 %v1628, 4294901760
  %v1630 = vsub.f32 %v1628, %v1629
  %v1631 = vand.u32 %v1630, 4294901760
  %1632 = vmatpush1.msra.mxu0 %v1631
  %1633 = vmatprep.subr.mxu0 0.0
  %v1634 = vand.u32 %v975, 4294901760
  %v1635 = vsub.f32 %v975, %v1634
  %v1636 = vand.u32 %v1635, 4294901760
  %v1637 = vsub.f32 %v1635, %v1636
  %v1638 = vand.u32 %v1637, 4294901760
  %1639 = vmatpush1.msra.mxu0 %v1638
  %1640 = vmatprep.subr.mxu0 0.0
  %1641 = vmatpush2.msra.mxu0 0.0
  %1642 = vmatprep.subr.mxu0 0.0
  %1643 = vmatpush2.msra.mxu0 0.0
  %1644 = vmatprep.subr.mxu0 0.0
  %1645 = vmatpush2.msra.mxu0 0.0
  %1646 = vmatprep.subr.mxu0 0.0
  %1647 = vmatpush2.msra.mxu0 0.0
  %1648 = vmatprep.subr.mxu0 0.0
  %1649 = vmatpush2.msra.mxu0 0.0
  %1650 = vmatprep.subr.mxu0 0.0
  %1651 = vmatpush2.msra.mxu0 0.0
  %1652 = vmatprep.subr.mxu0 0.0
  %1653 = vmatpush2.msra.mxu0 0.0
  %1654 = vmatprep.subr.mxu0 0.0
  %1655 = vmatpush2.msra.mxu0 0.0
  %1656 = vmatprep.subr.mxu0 0.0
  %1657 = vmatpush2.msra.mxu0 0.0
  %1658 = vmatprep.subr.mxu0 0.0
  %1659 = vmatpush2.msra.mxu0 0.0
  %1660 = vmatprep.subr.mxu0 0.0
  %1661 = vmatpush2.msra.mxu0 0.0
  %1662 = vmatprep.subr.mxu0 0.0
  %1663 = vmatpush2.msra.mxu0 0.0
  %1664 = vmatprep.subr.mxu0 0.0
  %1665 = vmatpush2.msra.mxu0 0.0
  %1666 = vmatprep.subr.mxu0 0.0
  %1667 = vmatpush2.msra.mxu0 0.0
  %1668 = vmatprep.subr.mxu0 0.0
  %1669 = vmatpush2.msra.mxu0 0.0
  %1670 = vmatprep.subr.mxu0 0.0
  %1671 = vmatpush2.msra.mxu0 0.0
  %1672 = vmatprep.mubr.f32.mxu0 0.0
  %v1673 = vand.u32 %v1507, 4294901760
  %1674 = vmatmul.mubr.f32.gmra.mxu0 %v1673
  %v1675 = vpop.f32.mrf.mxu0
  %v1676 = vadd.f32 %v1585, %v1675
  %v1677 = vpop.f32.mrf.mxu0
  %1678 = vdwg.mxu0
  %1679 = vmatprep.subr.mxu0 0.0
  %1680 = vmatpush1.msra.mxu0 0.0
  %1681 = vmatprep.subr.mxu0 0.0
  %1682 = vmatpush1.msra.mxu0 0.0
  %1683 = vmatprep.subr.mxu0 0.0
  %1684 = vmatpush1.msra.mxu0 0.0
  %1685 = vmatprep.subr.mxu0 0.0
  %1686 = vmatpush1.msra.mxu0 0.0
  %1687 = vmatprep.subr.mxu0 0.0
  %1688 = vmatpush1.msra.mxu0 0.0
  %1689 = vmatprep.subr.mxu0 0.0
  %1690 = vmatpush1.msra.mxu0 0.0
  %1691 = vmatprep.subr.mxu0 0.0
  %1692 = vmatpush1.msra.mxu0 0.0
  %1693 = vmatprep.subr.mxu0 0.0
  %1694 = vmatpush1.msra.mxu0 0.0
  %1695 = vmatprep.subr.mxu0 0.0
  %1696 = vmatpush1.msra.mxu0 0.0
  %1697 = vmatprep.subr.mxu0 0.0
  %1698 = vmatpush1.msra.mxu0 0.0
  %1699 = vmatprep.subr.mxu0 0.0
  %1700 = vmatpush1.msra.mxu0 0.0
  %1701 = vmatprep.subr.mxu0 0.0
  %1702 = vmatpush1.msra.mxu0 0.0
  %1703 = vmatprep.subr.mxu0 0.0
  %v1704 = vand.u32 %v978, 4294901760
  %v1705 = vsub.f32 %v978, %v1704
  %1706 = vmatpush1.msra.mxu0 %v1705
  %1707 = vmatprep.subr.mxu0 0.0
  %v1708 = vand.u32 %v977, 4294901760
  %v1709 = vsub.f32 %v977, %v1708
  %1710 = vmatpush1.msra.mxu0 %v1709
  %1711 = vmatprep.subr.mxu0 0.0
  %v1712 = vand.u32 %v976, 4294901760
  %v1713 = vsub.f32 %v976, %v1712
  %1714 = vmatpush1.msra.mxu0 %v1713
  %1715 = vmatprep.subr.mxu0 0.0
  %v1716 = vand.u32 %v975, 4294901760
  %v1717 = vsub.f32 %v975, %v1716
  %1718 = vmatpush1.msra.mxu0 %v1717
  %1719 = vmatprep.subr.mxu0 0.0
  %1720 = vmatpush2.msra.mxu0 0.0
  %1721 = vmatprep.subr.mxu0 0.0
  %1722 = vmatpush2.msra.mxu0 0.0
  %1723 = vmatprep.subr.mxu0 0.0
  %1724 = vmatpush2.msra.mxu0 0.0
  %1725 = vmatprep.subr.mxu0 0.0
  %1726 = vmatpush2.msra.mxu0 0.0
  %1727 = vmatprep.subr.mxu0 0.0
  %1728 = vmatpush2.msra.mxu0 0.0
  %1729 = vmatprep.subr.mxu0 0.0
  %1730 = vmatpush2.msra.mxu0 0.0
  %1731 = vmatprep.subr.mxu0 0.0
  %1732 = vmatpush2.msra.mxu0 0.0
  %1733 = vmatprep.subr.mxu0 0.0
  %1734 = vmatpush2.msra.mxu0 0.0
  %1735 = vmatprep.subr.mxu0 0.0
  %1736 = vmatpush2.msra.mxu0 0.0
  %1737 = vmatprep.subr.mxu0 0.0
  %1738 = vmatpush2.msra.mxu0 0.0
  %1739 = vmatprep.subr.mxu0 0.0
  %1740 = vmatpush2.msra.mxu0 0.0
  %1741 = vmatprep.subr.mxu0 0.0
  %1742 = vmatpush2.msra.mxu0 0.0
  %1743 = vmatprep.subr.mxu0 0.0
  %1744 = vmatpush2.msra.mxu0 0.0
  %1745 = vmatprep.subr.mxu0 0.0
  %1746 = vmatpush2.msra.mxu0 0.0
  %1747 = vmatprep.subr.mxu0 0.0
  %1748 = vmatpush2.msra.mxu0 0.0
  %1749 = vmatprep.subr.mxu0 0.0
  %1750 = vmatpush2.msra.mxu0 0.0
  %1751 = vmatprep.mubr.f32.mxu0 0.0
  %v1752 = vand.u32 %v1507, 4294901760
  %v1753 = vsub.f32 %v1507, %v1752
  %1754 = vmatmul.mubr.f32.gmra.mxu0 %v1753
  %v1755 = vpop.f32.mrf.mxu0
  %v1756 = vadd.f32 %v1676, %v1755
  %v1757 = vpop.f32.mrf.mxu0
  %1758 = vdwg.mxu0
  %1759 = vmatprep.subr.mxu0 0.0
  %1760 = vmatpush1.msra.mxu0 0.0
  %1761 = vmatprep.subr.mxu0 0.0
  %1762 = vmatpush1.msra.mxu0 0.0
  %1763 = vmatprep.subr.mxu0 0.0
  %1764 = vmatpush1.msra.mxu0 0.0
  %1765 = vmatprep.subr.mxu0 0.0
  %1766 = vmatpush1.msra.mxu0 0.0
  %1767 = vmatprep.subr.mxu0 0.0
  %1768 = vmatpush1.msra.mxu0 0.0
  %1769 = vmatprep.subr.mxu0 0.0
  %1770 = vmatpush1.msra.mxu0 0.0
  %1771 = vmatprep.subr.mxu0 0.0
  %1772 = vmatpush1.msra.mxu0 0.0
  %1773 = vmatprep.subr.mxu0 0.0
  %1774 = vmatpush1.msra.mxu0 0.0
  %1775 = vmatprep.subr.mxu0 0.0
  %1776 = vmatpush1.msra.mxu0 0.0
  %1777 = vmatprep.subr.mxu0 0.0
  %1778 = vmatpush1.msra.mxu0 0.0
  %1779 = vmatprep.subr.mxu0 0.0
  %1780 = vmatpush1.msra.mxu0 0.0
  %1781 = vmatprep.subr.mxu0 0.0
  %1782 = vmatpush1.msra.mxu0 0.0
  %1783 = vmatprep.subr.mxu0 0.0
  %v1784 = vand.u32 %v978, 4294901760
  %1785 = vmatpush1.msra.mxu0 %v1784
  %1786 = vmatprep.subr.mxu0 0.0
  %v1787 = vand.u32 %v977, 4294901760
  %1788 = vmatpush1.msra.mxu0 %v1787
  %1789 = vmatprep.subr.mxu0 0.0
  %v1790 = vand.u32 %v976, 4294901760
  %1791 = vmatpush1.msra.mxu0 %v1790
  %1792 = vmatprep.subr.mxu0 0.0
  %v1793 = vand.u32 %v975, 4294901760
  %1794 = vmatpush1.msra.mxu0 %v1793
  %1795 = vmatprep.subr.mxu0 0.0
  %1796 = vmatpush2.msra.mxu0 0.0
  %1797 = vmatprep.subr.mxu0 0.0
  %1798 = vmatpush2.msra.mxu0 0.0
  %1799 = vmatprep.subr.mxu0 0.0
  %1800 = vmatpush2.msra.mxu0 0.0
  %1801 = vmatprep.subr.mxu0 0.0
  %1802 = vmatpush2.msra.mxu0 0.0
  %1803 = vmatprep.subr.mxu0 0.0
  %1804 = vmatpush2.msra.mxu0 0.0
  %1805 = vmatprep.subr.mxu0 0.0
  %1806 = vmatpush2.msra.mxu0 0.0
  %1807 = vmatprep.subr.mxu0 0.0
  %1808 = vmatpush2.msra.mxu0 0.0
  %1809 = vmatprep.subr.mxu0 0.0
  %1810 = vmatpush2.msra.mxu0 0.0
  %1811 = vmatprep.subr.mxu0 0.0
  %1812 = vmatpush2.msra.mxu0 0.0
  %1813 = vmatprep.subr.mxu0 0.0
  %1814 = vmatpush2.msra.mxu0 0.0
  %1815 = vmatprep.subr.mxu0 0.0
  %1816 = vmatpush2.msra.mxu0 0.0
  %1817 = vmatprep.subr.mxu0 0.0
  %1818 = vmatpush2.msra.mxu0 0.0
  %1819 = vmatprep.subr.mxu0 0.0
  %1820 = vmatpush2.msra.mxu0 0.0
  %1821 = vmatprep.subr.mxu0 0.0
  %1822 = vmatpush2.msra.mxu0 0.0
  %1823 = vmatprep.subr.mxu0 0.0
  %1824 = vmatpush2.msra.mxu0 0.0
  %1825 = vmatprep.subr.mxu0 0.0
  %1826 = vmatpush2.msra.mxu0 0.0
  %1827 = vmatprep.mubr.f32.mxu0 0.0
  %v1828 = vand.u32 %v1507, 4294901760
  %v1829 = vsub.f32 %v1507, %v1828
  %v1830 = vand.u32 %v1829, 4294901760
  %1831 = vmatmul.mubr.f32.gmra.mxu0 %v1830
  %v1832 = vpop.f32.mrf.mxu0
  %v1833 = vadd.f32 %v1756, %v1832
  %v1834 = vpop.f32.mrf.mxu0
  %1835 = vdwg.mxu0
  %1836 = vmatprep.subr.mxu0 0.0
  %1837 = vmatpush1.msra.mxu0 0.0
  %1838 = vmatprep.subr.mxu0 0.0
  %1839 = vmatpush1.msra.mxu0 0.0
  %1840 = vmatprep.subr.mxu0 0.0
  %1841 = vmatpush1.msra.mxu0 0.0
  %1842 = vmatprep.subr.mxu0 0.0
  %1843 = vmatpush1.msra.mxu0 0.0
  %1844 = vmatprep.subr.mxu0 0.0
  %1845 = vmatpush1.msra.mxu0 0.0
  %1846 = vmatprep.subr.mxu0 0.0
  %1847 = vmatpush1.msra.mxu0 0.0
  %1848 = vmatprep.subr.mxu0 0.0
  %1849 = vmatpush1.msra.mxu0 0.0
  %1850 = vmatprep.subr.mxu0 0.0
  %1851 = vmatpush1.msra.mxu0 0.0
  %1852 = vmatprep.subr.mxu0 0.0
  %1853 = vmatpush1.msra.mxu0 0.0
  %1854 = vmatprep.subr.mxu0 0.0
  %1855 = vmatpush1.msra.mxu0 0.0
  %1856 = vmatprep.subr.mxu0 0.0
  %1857 = vmatpush1.msra.mxu0 0.0
  %1858 = vmatprep.subr.mxu0 0.0
  %1859 = vmatpush1.msra.mxu0 0.0
  %1860 = vmatprep.subr.mxu0 0.0
  %v1861 = vand.u32 %v978, 4294901760
  %v1862 = vsub.f32 %v978, %v1861
  %v1863 = vand.u32 %v1862, 4294901760
  %1864 = vmatpush1.msra.mxu0 %v1863
  %1865 = vmatprep.subr.mxu0 0.0
  %v1866 = vand.u32 %v977, 4294901760
  %v1867 = vsub.f32 %v977, %v1866
  %v1868 = vand.u32 %v1867, 4294901760
  %1869 = vmatpush1.msra.mxu0 %v1868
  %1870 = vmatprep.subr.mxu0 0.0
  %v1871 = vand.u32 %v976, 4294901760
  %v1872 = vsub.f32 %v976, %v1871
  %v1873 = vand.u32 %v1872, 4294901760
  %1874 = vmatpush1.msra.mxu0 %v1873
  %1875 = vmatprep.subr.mxu0 0.0
  %v1876 = vand.u32 %v975, 4294901760
  %v1877 = vsub.f32 %v975, %v1876
  %v1878 = vand.u32 %v1877, 4294901760
  %1879 = vmatpush1.msra.mxu0 %v1878
  %1880 = vmatprep.subr.mxu0 0.0
  %1881 = vmatpush2.msra.mxu0 0.0
  %1882 = vmatprep.subr.mxu0 0.0
  %1883 = vmatpush2.msra.mxu0 0.0
  %1884 = vmatprep.subr.mxu0 0.0
  %1885 = vmatpush2.msra.mxu0 0.0
  %1886 = vmatprep.subr.mxu0 0.0
  %1887 = vmatpush2.msra.mxu0 0.0
  %1888 = vmatprep.subr.mxu0 0.0
  %1889 = vmatpush2.msra.mxu0 0.0
  %1890 = vmatprep.subr.mxu0 0.0
  %1891 = vmatpush2.msra.mxu0 0.0
  %1892 = vmatprep.subr.mxu0 0.0
  %1893 = vmatpush2.msra.mxu0 0.0
  %1894 = vmatprep.subr.mxu0 0.0
  %1895 = vmatpush2.msra.mxu0 0.0
  %1896 = vmatprep.subr.mxu0 0.0
  %1897 = vmatpush2.msra.mxu0 0.0
  %1898 = vmatprep.subr.mxu0 0.0
  %1899 = vmatpush2.msra.mxu0 0.0
  %1900 = vmatprep.subr.mxu0 0.0
  %1901 = vmatpush2.msra.mxu0 0.0
  %1902 = vmatprep.subr.mxu0 0.0
  %1903 = vmatpush2.msra.mxu0 0.0
  %1904 = vmatprep.subr.mxu0 0.0
  %1905 = vmatpush2.msra.mxu0 0.0
  %1906 = vmatprep.subr.mxu0 0.0
  %1907 = vmatpush2.msra.mxu0 0.0
  %1908 = vmatprep.subr.mxu0 0.0
  %1909 = vmatpush2.msra.mxu0 0.0
  %1910 = vmatprep.subr.mxu0 0.0
  %1911 = vmatpush2.msra.mxu0 0.0
  %1912 = vmatprep.mubr.f32.mxu0 0.0
  %v1913 = vand.u32 %v1507, 4294901760
  %1914 = vmatmul.mubr.f32.gmra.mxu0 %v1913
  %v1915 = vpop.f32.mrf.mxu0
  %v1916 = vadd.f32 %v1833, %v1915
  %v1917 = vpop.f32.mrf.mxu0
  %1918 = vdwg.mxu0
  %1919 = vmatprep.subr.mxu0 0.0
  %1920 = vmatpush1.msra.mxu0 0.0
  %1921 = vmatprep.subr.mxu0 0.0
  %1922 = vmatpush1.msra.mxu0 0.0
  %1923 = vmatprep.subr.mxu0 0.0
  %1924 = vmatpush1.msra.mxu0 0.0
  %1925 = vmatprep.subr.mxu0 0.0
  %1926 = vmatpush1.msra.mxu0 0.0
  %1927 = vmatprep.subr.mxu0 0.0
  %1928 = vmatpush1.msra.mxu0 0.0
  %1929 = vmatprep.subr.mxu0 0.0
  %1930 = vmatpush1.msra.mxu0 0.0
  %1931 = vmatprep.subr.mxu0 0.0
  %1932 = vmatpush1.msra.mxu0 0.0
  %1933 = vmatprep.subr.mxu0 0.0
  %1934 = vmatpush1.msra.mxu0 0.0
  %1935 = vmatprep.subr.mxu0 0.0
  %1936 = vmatpush1.msra.mxu0 0.0
  %1937 = vmatprep.subr.mxu0 0.0
  %1938 = vmatpush1.msra.mxu0 0.0
  %1939 = vmatprep.subr.mxu0 0.0
  %1940 = vmatpush1.msra.mxu0 0.0
  %1941 = vmatprep.subr.mxu0 0.0
  %1942 = vmatpush1.msra.mxu0 0.0
  %1943 = vmatprep.subr.mxu0 0.0
  %v1944 = vand.u32 %v978, 4294901760
  %1945 = vmatpush1.msra.mxu0 %v1944
  %1946 = vmatprep.subr.mxu0 0.0
  %v1947 = vand.u32 %v977, 4294901760
  %1948 = vmatpush1.msra.mxu0 %v1947
  %1949 = vmatprep.subr.mxu0 0.0
  %v1950 = vand.u32 %v976, 4294901760
  %1951 = vmatpush1.msra.mxu0 %v1950
  %1952 = vmatprep.subr.mxu0 0.0
  %v1953 = vand.u32 %v975, 4294901760
  %1954 = vmatpush1.msra.mxu0 %v1953
  %1955 = vmatprep.subr.mxu0 0.0
  %1956 = vmatpush2.msra.mxu0 0.0
  %1957 = vmatprep.subr.mxu0 0.0
  %1958 = vmatpush2.msra.mxu0 0.0
  %1959 = vmatprep.subr.mxu0 0.0
  %1960 = vmatpush2.msra.mxu0 0.0
  %1961 = vmatprep.subr.mxu0 0.0
  %1962 = vmatpush2.msra.mxu0 0.0
  %1963 = vmatprep.subr.mxu0 0.0
  %1964 = vmatpush2.msra.mxu0 0.0
  %1965 = vmatprep.subr.mxu0 0.0
  %1966 = vmatpush2.msra.mxu0 0.0
  %1967 = vmatprep.subr.mxu0 0.0
  %1968 = vmatpush2.msra.mxu0 0.0
  %1969 = vmatprep.subr.mxu0 0.0
  %1970 = vmatpush2.msra.mxu0 0.0
  %1971 = vmatprep.subr.mxu0 0.0
  %1972 = vmatpush2.msra.mxu0 0.0
  %1973 = vmatprep.subr.mxu0 0.0
  %1974 = vmatpush2.msra.mxu0 0.0
  %1975 = vmatprep.subr.mxu0 0.0
  %1976 = vmatpush2.msra.mxu0 0.0
  %1977 = vmatprep.subr.mxu0 0.0
  %1978 = vmatpush2.msra.mxu0 0.0
  %1979 = vmatprep.subr.mxu0 0.0
  %1980 = vmatpush2.msra.mxu0 0.0
  %1981 = vmatprep.subr.mxu0 0.0
  %1982 = vmatpush2.msra.mxu0 0.0
  %1983 = vmatprep.subr.mxu0 0.0
  %1984 = vmatpush2.msra.mxu0 0.0
  %1985 = vmatprep.subr.mxu0 0.0
  %1986 = vmatpush2.msra.mxu0 0.0
  %1987 = vmatprep.mubr.f32.mxu0 0.0
  %v1988 = vand.u32 %v1507, 4294901760
  %1989 = vmatmul.mubr.f32.gmra.mxu0 %v1988
  %v1990 = vpop.f32.mrf.mxu0
  %v1991 = vadd.f32 %v1916, %v1990
  %v1992 = vpop.f32.mrf.mxu0
  %1993 = vdwg.mxu0
  %v1994 = vld [vmem:[%s4] sm:$0x1]
  %v1996 = vlaneseq
  %v1997 = vshrl.u32 %v1996, 7
  %v1998 = vsub.s32 0, %v1997
  %v1999 = vrot.slane %v1994, %v1998
  %v2001 = vadd.f32 %v1991, %v1999
  %v2002 = vmax.f32 %v2001, 0.0
  %v2003 = vld [vmem:[%s5] sm:$0xff]
  %v2004 = vld [vmem:[%s5 + $0x8] sm:$0xff]
  %v2005 = vld [vmem:[%s5 + $0x10] sm:$0xff]
  %v2006 = vld [vmem:[%s5 + $0x18] sm:$0xff]
  %v2007 = vld [vmem:[%s6] sm:$0x1]
  %v2009 = vlaneseq
  %v2010 = vshrl.u32 %v2009, 7
  %v2011 = vsub.s32 0, %v2010
  %v2012 = vrot.slane %v2007, %v2011
  %v2015 = vsel %vm44, %v2002, 0
  %2017 = vmatprep.subr.mxu0 0.0
  %2018 = vmatpush1.msra.mxu0 0.0
  %2019 = vmatprep.subr.mxu0 0.0
  %2020 = vmatpush1.msra.mxu0 0.0
  %2021 = vmatprep.subr.mxu0 0.0
  %2022 = vmatpush1.msra.mxu0 0.0
  %2023 = vmatprep.subr.mxu0 0.0
  %2024 = vmatpush1.msra.mxu0 0.0
  %2025 = vmatprep.subr.mxu0 0.0
  %2026 = vmatpush1.msra.mxu0 0.0
  %2027 = vmatprep.subr.mxu0 0.0
  %2028 = vmatpush1.msra.mxu0 0.0
  %2029 = vmatprep.subr.mxu0 0.0
  %2030 = vmatpush1.msra.mxu0 0.0
  %2031 = vmatprep.subr.mxu0 0.0
  %2032 = vmatpush1.msra.mxu0 0.0
  %2033 = vmatprep.subr.mxu0 0.0
  %2034 = vmatpush1.msra.mxu0 0.0
  %2035 = vmatprep.subr.mxu0 0.0
  %2036 = vmatpush1.msra.mxu0 0.0
  %2037 = vmatprep.subr.mxu0 0.0
  %2038 = vmatpush1.msra.mxu0 0.0
  %2039 = vmatprep.subr.mxu0 0.0
  %2040 = vmatpush1.msra.mxu0 0.0
  %2041 = vmatprep.subr.mxu0 0.0
  %v2042 = vand.u32 %v2006, 4294901760
  %2043 = vmatpush1.msra.mxu0 %v2042
  %2044 = vmatprep.subr.mxu0 0.0
  %v2045 = vand.u32 %v2005, 4294901760
  %2046 = vmatpush1.msra.mxu0 %v2045
  %2047 = vmatprep.subr.mxu0 0.0
  %v2048 = vand.u32 %v2004, 4294901760
  %2049 = vmatpush1.msra.mxu0 %v2048
  %2050 = vmatprep.subr.mxu0 0.0
  %v2051 = vand.u32 %v2003, 4294901760
  %2052 = vmatpush1.msra.mxu0 %v2051
  %2053 = vmatprep.subr.mxu0 0.0
  %2054 = vmatpush2.msra.mxu0 0.0
  %2055 = vmatprep.subr.mxu0 0.0
  %2056 = vmatpush2.msra.mxu0 0.0
  %2057 = vmatprep.subr.mxu0 0.0
  %2058 = vmatpush2.msra.mxu0 0.0
  %2059 = vmatprep.subr.mxu0 0.0
  %2060 = vmatpush2.msra.mxu0 0.0
  %2061 = vmatprep.subr.mxu0 0.0
  %2062 = vmatpush2.msra.mxu0 0.0
  %2063 = vmatprep.subr.mxu0 0.0
  %2064 = vmatpush2.msra.mxu0 0.0
  %2065 = vmatprep.subr.mxu0 0.0
  %2066 = vmatpush2.msra.mxu0 0.0
  %2067 = vmatprep.subr.mxu0 0.0
  %2068 = vmatpush2.msra.mxu0 0.0
  %2069 = vmatprep.subr.mxu0 0.0
  %2070 = vmatpush2.msra.mxu0 0.0
  %2071 = vmatprep.subr.mxu0 0.0
  %2072 = vmatpush2.msra.mxu0 0.0
  %2073 = vmatprep.subr.mxu0 0.0
  %2074 = vmatpush2.msra.mxu0 0.0
  %2075 = vmatprep.subr.mxu0 0.0
  %2076 = vmatpush2.msra.mxu0 0.0
  %2077 = vmatprep.subr.mxu0 0.0
  %2078 = vmatpush2.msra.mxu0 0.0
  %2079 = vmatprep.subr.mxu0 0.0
  %2080 = vmatpush2.msra.mxu0 0.0
  %2081 = vmatprep.subr.mxu0 0.0
  %2082 = vmatpush2.msra.mxu0 0.0
  %2083 = vmatprep.subr.mxu0 0.0
  %2084 = vmatpush2.msra.mxu0 0.0
  %2085 = vmatprep.mubr.f32.mxu0 0.0
  %v2086 = vand.u32 %v2015, 4294901760
  %v2087 = vsub.f32 %v2015, %v2086
  %v2088 = vand.u32 %v2087, 4294901760
  %v2089 = vsub.f32 %v2087, %v2088
  %v2090 = vand.u32 %v2089, 4294901760
  %2091 = vmatmul.mubr.f32.gmra.mxu0 %v2090
  %v2092 = vpop.f32.mrf.mxu0
  %v2093 = vadd.f32 %v2012, %v2092
  %v2094 = vpop.f32.mrf.mxu0
  %2095 = vdwg.mxu0
  %2096 = vmatprep.subr.mxu0 0.0
  %2097 = vmatpush1.msra.mxu0 0.0
  %2098 = vmatprep.subr.mxu0 0.0
  %2099 = vmatpush1.msra.mxu0 0.0
  %2100 = vmatprep.subr.mxu0 0.0
  %2101 = vmatpush1.msra.mxu0 0.0
  %2102 = vmatprep.subr.mxu0 0.0
  %2103 = vmatpush1.msra.mxu0 0.0
  %2104 = vmatprep.subr.mxu0 0.0
  %2105 = vmatpush1.msra.mxu0 0.0
  %2106 = vmatprep.subr.mxu0 0.0
  %2107 = vmatpush1.msra.mxu0 0.0
  %2108 = vmatprep.subr.mxu0 0.0
  %2109 = vmatpush1.msra.mxu0 0.0
  %2110 = vmatprep.subr.mxu0 0.0
  %2111 = vmatpush1.msra.mxu0 0.0
  %2112 = vmatprep.subr.mxu0 0.0
  %2113 = vmatpush1.msra.mxu0 0.0
  %2114 = vmatprep.subr.mxu0 0.0
  %2115 = vmatpush1.msra.mxu0 0.0
  %2116 = vmatprep.subr.mxu0 0.0
  %2117 = vmatpush1.msra.mxu0 0.0
  %2118 = vmatprep.subr.mxu0 0.0
  %2119 = vmatpush1.msra.mxu0 0.0
  %2120 = vmatprep.subr.mxu0 0.0
  %v2121 = vand.u32 %v2006, 4294901760
  %v2122 = vsub.f32 %v2006, %v2121
  %v2123 = vand.u32 %v2122, 4294901760
  %v2124 = vsub.f32 %v2122, %v2123
  %v2125 = vand.u32 %v2124, 4294901760
  %2126 = vmatpush1.msra.mxu0 %v2125
  %2127 = vmatprep.subr.mxu0 0.0
  %v2128 = vand.u32 %v2005, 4294901760
  %v2129 = vsub.f32 %v2005, %v2128
  %v2130 = vand.u32 %v2129, 4294901760
  %v2131 = vsub.f32 %v2129, %v2130
  %v2132 = vand.u32 %v2131, 4294901760
  %2133 = vmatpush1.msra.mxu0 %v2132
  %2134 = vmatprep.subr.mxu0 0.0
  %v2135 = vand.u32 %v2004, 4294901760
  %v2136 = vsub.f32 %v2004, %v2135
  %v2137 = vand.u32 %v2136, 4294901760
  %v2138 = vsub.f32 %v2136, %v2137
  %v2139 = vand.u32 %v2138, 4294901760
  %2140 = vmatpush1.msra.mxu0 %v2139
  %2141 = vmatprep.subr.mxu0 0.0
  %v2142 = vand.u32 %v2003, 4294901760
  %v2143 = vsub.f32 %v2003, %v2142
  %v2144 = vand.u32 %v2143, 4294901760
  %v2145 = vsub.f32 %v2143, %v2144
  %v2146 = vand.u32 %v2145, 4294901760
  %2147 = vmatpush1.msra.mxu0 %v2146
  %2148 = vmatprep.subr.mxu0 0.0
  %2149 = vmatpush2.msra.mxu0 0.0
  %2150 = vmatprep.subr.mxu0 0.0
  %2151 = vmatpush2.msra.mxu0 0.0
  %2152 = vmatprep.subr.mxu0 0.0
  %2153 = vmatpush2.msra.mxu0 0.0
  %2154 = vmatprep.subr.mxu0 0.0
  %2155 = vmatpush2.msra.mxu0 0.0
  %2156 = vmatprep.subr.mxu0 0.0
  %2157 = vmatpush2.msra.mxu0 0.0
  %2158 = vmatprep.subr.mxu0 0.0
  %2159 = vmatpush2.msra.mxu0 0.0
  %2160 = vmatprep.subr.mxu0 0.0
  %2161 = vmatpush2.msra.mxu0 0.0
  %2162 = vmatprep.subr.mxu0 0.0
  %2163 = vmatpush2.msra.mxu0 0.0
  %2164 = vmatprep.subr.mxu0 0.0
  %2165 = vmatpush2.msra.mxu0 0.0
  %2166 = vmatprep.subr.mxu0 0.0
  %2167 = vmatpush2.msra.mxu0 0.0
  %2168 = vmatprep.subr.mxu0 0.0
  %2169 = vmatpush2.msra.mxu0 0.0
  %2170 = vmatprep.subr.mxu0 0.0
  %2171 = vmatpush2.msra.mxu0 0.0
  %2172 = vmatprep.subr.mxu0 0.0
  %2173 = vmatpush2.msra.mxu0 0.0
  %2174 = vmatprep.subr.mxu0 0.0
  %2175 = vmatpush2.msra.mxu0 0.0
  %2176 = vmatprep.subr.mxu0 0.0
  %2177 = vmatpush2.msra.mxu0 0.0
  %2178 = vmatprep.subr.mxu0 0.0
  %2179 = vmatpush2.msra.mxu0 0.0
  %2180 = vmatprep.mubr.f32.mxu0 0.0
  %v2181 = vand.u32 %v2015, 4294901760
  %2182 = vmatmul.mubr.f32.gmra.mxu0 %v2181
  %v2183 = vpop.f32.mrf.mxu0
  %v2184 = vadd.f32 %v2093, %v2183
  %v2185 = vpop.f32.mrf.mxu0
  %2186 = vdwg.mxu0
  %2187 = vmatprep.subr.mxu0 0.0
  %2188 = vmatpush1.msra.mxu0 0.0
  %2189 = vmatprep.subr.mxu0 0.0
  %2190 = vmatpush1.msra.mxu0 0.0
  %2191 = vmatprep.subr.mxu0 0.0
  %2192 = vmatpush1.msra.mxu0 0.0
  %2193 = vmatprep.subr.mxu0 0.0
  %2194 = vmatpush1.msra.mxu0 0.0
  %2195 = vmatprep.subr.mxu0 0.0
  %2196 = vmatpush1.msra.mxu0 0.0
  %2197 = vmatprep.subr.mxu0 0.0
  %2198 = vmatpush1.msra.mxu0 0.0
  %2199 = vmatprep.subr.mxu0 0.0
  %2200 = vmatpush1.msra.mxu0 0.0
  %2201 = vmatprep.subr.mxu0 0.0
  %2202 = vmatpush1.msra.mxu0 0.0
  %2203 = vmatprep.subr.mxu0 0.0
  %2204 = vmatpush1.msra.mxu0 0.0
  %2205 = vmatprep.subr.mxu0 0.0
  %2206 = vmatpush1.msra.mxu0 0.0
  %2207 = vmatprep.subr.mxu0 0.0
  %2208 = vmatpush1.msra.mxu0 0.0
  %2209 = vmatprep.subr.mxu0 0.0
  %2210 = vmatpush1.msra.mxu0 0.0
  %2211 = vmatprep.subr.mxu0 0.0
  %v2212 = vand.u32 %v2006, 4294901760
  %v2213 = vsub.f32 %v2006, %v2212
  %2214 = vmatpush1.msra.mxu0 %v2213
  %2215 = vmatprep.subr.mxu0 0.0
  %v2216 = vand.u32 %v2005, 4294901760
  %v2217 = vsub.f32 %v2005, %v2216
  %2218 = vmatpush1.msra.mxu0 %v2217
  %2219 = vmatprep.subr.mxu0 0.0
  %v2220 = vand.u32 %v2004, 4294901760
  %v2221 = vsub.f32 %v2004, %v2220
  %2222 = vmatpush1.msra.mxu0 %v2221
  %2223 = vmatprep.subr.mxu0 0.0
  %v2224 = vand.u32 %v2003, 4294901760
  %v2225 = vsub.f32 %v2003, %v2224
  %2226 = vmatpush1.msra.mxu0 %v2225
  %2227 = vmatprep.subr.mxu0 0.0
  %2228 = vmatpush2.msra.mxu0 0.0
  %2229 = vmatprep.subr.mxu0 0.0
  %2230 = vmatpush2.msra.mxu0 0.0
  %2231 = vmatprep.subr.mxu0 0.0
  %2232 = vmatpush2.msra.mxu0 0.0
  %2233 = vmatprep.subr.mxu0 0.0
  %2234 = vmatpush2.msra.mxu0 0.0
  %2235 = vmatprep.subr.mxu0 0.0
  %2236 = vmatpush2.msra.mxu0 0.0
  %2237 = vmatprep.subr.mxu0 0.0
  %2238 = vmatpush2.msra.mxu0 0.0
  %2239 = vmatprep.subr.mxu0 0.0
  %2240 = vmatpush2.msra.mxu0 0.0
  %2241 = vmatprep.subr.mxu0 0.0
  %2242 = vmatpush2.msra.mxu0 0.0
  %2243 = vmatprep.subr.mxu0 0.0
  %2244 = vmatpush2.msra.mxu0 0.0
  %2245 = vmatprep.subr.mxu0 0.0
  %2246 = vmatpush2.msra.mxu0 0.0
  %2247 = vmatprep.subr.mxu0 0.0
  %2248 = vmatpush2.msra.mxu0 0.0
  %2249 = vmatprep.subr.mxu0 0.0
  %2250 = vmatpush2.msra.mxu0 0.0
  %2251 = vmatprep.subr.mxu0 0.0
  %2252 = vmatpush2.msra.mxu0 0.0
  %2253 = vmatprep.subr.mxu0 0.0
  %2254 = vmatpush2.msra.mxu0 0.0
  %2255 = vmatprep.subr.mxu0 0.0
  %2256 = vmatpush2.msra.mxu0 0.0
  %2257 = vmatprep.subr.mxu0 0.0
  %2258 = vmatpush2.msra.mxu0 0.0
  %2259 = vmatprep.mubr.f32.mxu0 0.0
  %v2260 = vand.u32 %v2015, 4294901760
  %v2261 = vsub.f32 %v2015, %v2260
  %2262 = vmatmul.mubr.f32.gmra.mxu0 %v2261
  %v2263 = vpop.f32.mrf.mxu0
  %v2264 = vadd.f32 %v2184, %v2263
  %v2265 = vpop.f32.mrf.mxu0
  %2266 = vdwg.mxu0
  %2267 = vmatprep.subr.mxu0 0.0
  %2268 = vmatpush1.msra.mxu0 0.0
  %2269 = vmatprep.subr.mxu0 0.0
  %2270 = vmatpush1.msra.mxu0 0.0
  %2271 = vmatprep.subr.mxu0 0.0
  %2272 = vmatpush1.msra.mxu0 0.0
  %2273 = vmatprep.subr.mxu0 0.0
  %2274 = vmatpush1.msra.mxu0 0.0
  %2275 = vmatprep.subr.mxu0 0.0
  %2276 = vmatpush1.msra.mxu0 0.0
  %2277 = vmatprep.subr.mxu0 0.0
  %2278 = vmatpush1.msra.mxu0 0.0
  %2279 = vmatprep.subr.mxu0 0.0
  %2280 = vmatpush1.msra.mxu0 0.0
  %2281 = vmatprep.subr.mxu0 0.0
  %2282 = vmatpush1.msra.mxu0 0.0
  %2283 = vmatprep.subr.mxu0 0.0
  %2284 = vmatpush1.msra.mxu0 0.0
  %2285 = vmatprep.subr.mxu0 0.0
  %2286 = vmatpush1.msra.mxu0 0.0
  %2287 = vmatprep.subr.mxu0 0.0
  %2288 = vmatpush1.msra.mxu0 0.0
  %2289 = vmatprep.subr.mxu0 0.0
  %2290 = vmatpush1.msra.mxu0 0.0
  %2291 = vmatprep.subr.mxu0 0.0
  %v2292 = vand.u32 %v2006, 4294901760
  %2293 = vmatpush1.msra.mxu0 %v2292
  %2294 = vmatprep.subr.mxu0 0.0
  %v2295 = vand.u32 %v2005, 4294901760
  %2296 = vmatpush1.msra.mxu0 %v2295
  %2297 = vmatprep.subr.mxu0 0.0
  %v2298 = vand.u32 %v2004, 4294901760
  %2299 = vmatpush1.msra.mxu0 %v2298
  %2300 = vmatprep.subr.mxu0 0.0
  %v2301 = vand.u32 %v2003, 4294901760
  %2302 = vmatpush1.msra.mxu0 %v2301
  %2303 = vmatprep.subr.mxu0 0.0
  %2304 = vmatpush2.msra.mxu0 0.0
  %2305 = vmatprep.subr.mxu0 0.0
  %2306 = vmatpush2.msra.mxu0 0.0
  %2307 = vmatprep.subr.mxu0 0.0
  %2308 = vmatpush2.msra.mxu0 0.0
  %2309 = vmatprep.subr.mxu0 0.0
  %2310 = vmatpush2.msra.mxu0 0.0
  %2311 = vmatprep.subr.mxu0 0.0
  %2312 = vmatpush2.msra.mxu0 0.0
  %2313 = vmatprep.subr.mxu0 0.0
  %2314 = vmatpush2.msra.mxu0 0.0
  %2315 = vmatprep.subr.mxu0 0.0
  %2316 = vmatpush2.msra.mxu0 0.0
  %2317 = vmatprep.subr.mxu0 0.0
  %2318 = vmatpush2.msra.mxu0 0.0
  %2319 = vmatprep.subr.mxu0 0.0
  %2320 = vmatpush2.msra.mxu0 0.0
  %2321 = vmatprep.subr.mxu0 0.0
  %2322 = vmatpush2.msra.mxu0 0.0
  %2323 = vmatprep.subr.mxu0 0.0
  %2324 = vmatpush2.msra.mxu0 0.0
  %2325 = vmatprep.subr.mxu0 0.0
  %2326 = vmatpush2.msra.mxu0 0.0
  %2327 = vmatprep.subr.mxu0 0.0
  %2328 = vmatpush2.msra.mxu0 0.0
  %2329 = vmatprep.subr.mxu0 0.0
  %2330 = vmatpush2.msra.mxu0 0.0
  %2331 = vmatprep.subr.mxu0 0.0
  %2332 = vmatpush2.msra.mxu0 0.0
  %2333 = vmatprep.subr.mxu0 0.0
  %2334 = vmatpush2.msra.mxu0 0.0
  %2335 = vmatprep.mubr.f32.mxu0 0.0
  %v2336 = vand.u32 %v2015, 4294901760
  %v2337 = vsub.f32 %v2015, %v2336
  %v2338 = vand.u32 %v2337, 4294901760
  %2339 = vmatmul.mubr.f32.gmra.mxu0 %v2338
  %v2340 = vpop.f32.mrf.mxu0
  %v2341 = vadd.f32 %v2264, %v2340
  %v2342 = vpop.f32.mrf.mxu0
  %2343 = vdwg.mxu0
  %2344 = vmatprep.subr.mxu0 0.0
  %2345 = vmatpush1.msra.mxu0 0.0
  %2346 = vmatprep.subr.mxu0 0.0
  %2347 = vmatpush1.msra.mxu0 0.0
  %2348 = vmatprep.subr.mxu0 0.0
  %2349 = vmatpush1.msra.mxu0 0.0
  %2350 = vmatprep.subr.mxu0 0.0
  %2351 = vmatpush1.msra.mxu0 0.0
  %2352 = vmatprep.subr.mxu0 0.0
  %2353 = vmatpush1.msra.mxu0 0.0
  %2354 = vmatprep.subr.mxu0 0.0
  %2355 = vmatpush1.msra.mxu0 0.0
  %2356 = vmatprep.subr.mxu0 0.0
  %2357 = vmatpush1.msra.mxu0 0.0
  %2358 = vmatprep.subr.mxu0 0.0
  %2359 = vmatpush1.msra.mxu0 0.0
  %2360 = vmatprep.subr.mxu0 0.0
  %2361 = vmatpush1.msra.mxu0 0.0
  %2362 = vmatprep.subr.mxu0 0.0
  %2363 = vmatpush1.msra.mxu0 0.0
  %2364 = vmatprep.subr.mxu0 0.0
  %2365 = vmatpush1.msra.mxu0 0.0
  %2366 = vmatprep.subr.mxu0 0.0
  %2367 = vmatpush1.msra.mxu0 0.0
  %2368 = vmatprep.subr.mxu0 0.0
  %v2369 = vand.u32 %v2006, 4294901760
  %v2370 = vsub.f32 %v2006, %v2369
  %v2371 = vand.u32 %v2370, 4294901760
  %2372 = vmatpush1.msra.mxu0 %v2371
  %2373 = vmatprep.subr.mxu0 0.0
  %v2374 = vand.u32 %v2005, 4294901760
  %v2375 = vsub.f32 %v2005, %v2374
  %v2376 = vand.u32 %v2375, 4294901760
  %2377 = vmatpush1.msra.mxu0 %v2376
  %2378 = vmatprep.subr.mxu0 0.0
  %v2379 = vand.u32 %v2004, 4294901760
  %v2380 = vsub.f32 %v2004, %v2379
  %v2381 = vand.u32 %v2380, 4294901760
  %2382 = vmatpush1.msra.mxu0 %v2381
  %2383 = vmatprep.subr.mxu0 0.0
  %v2384 = vand.u32 %v2003, 4294901760
  %v2385 = vsub.f32 %v2003, %v2384
  %v2386 = vand.u32 %v2385, 4294901760
  %2387 = vmatpush1.msra.mxu0 %v2386
  %2388 = vmatprep.subr.mxu0 0.0
  %2389 = vmatpush2.msra.mxu0 0.0
  %2390 = vmatprep.subr.mxu0 0.0
  %2391 = vmatpush2.msra.mxu0 0.0
  %2392 = vmatprep.subr.mxu0 0.0
  %2393 = vmatpush2.msra.mxu0 0.0
  %2394 = vmatprep.subr.mxu0 0.0
  %2395 = vmatpush2.msra.mxu0 0.0
  %2396 = vmatprep.subr.mxu0 0.0
  %2397 = vmatpush2.msra.mxu0 0.0
  %2398 = vmatprep.subr.mxu0 0.0
  %2399 = vmatpush2.msra.mxu0 0.0
  %2400 = vmatprep.subr.mxu0 0.0
  %2401 = vmatpush2.msra.mxu0 0.0
  %2402 = vmatprep.subr.mxu0 0.0
  %2403 = vmatpush2.msra.mxu0 0.0
  %2404 = vmatprep.subr.mxu0 0.0
  %2405 = vmatpush2.msra.mxu0 0.0
  %2406 = vmatprep.subr.mxu0 0.0
  %2407 = vmatpush2.msra.mxu0 0.0
  %2408 = vmatprep.subr.mxu0 0.0
  %2409 = vmatpush2.msra.mxu0 0.0
  %2410 = vmatprep.subr.mxu0 0.0
  %2411 = vmatpush2.msra.mxu0 0.0
  %2412 = vmatprep.subr.mxu0 0.0
  %2413 = vmatpush2.msra.mxu0 0.0
  %2414 = vmatprep.subr.mxu0 0.0
  %2415 = vmatpush2.msra.mxu0 0.0
  %2416 = vmatprep.subr.mxu0 0.0
  %2417 = vmatpush2.msra.mxu0 0.0
  %2418 = vmatprep.subr.mxu0 0.0
  %2419 = vmatpush2.msra.mxu0 0.0
  %2420 = vmatprep.mubr.f32.mxu0 0.0
  %v2421 = vand.u32 %v2015, 4294901760
  %2422 = vmatmul.mubr.f32.gmra.mxu0 %v2421
  %v2423 = vpop.f32.mrf.mxu0
  %v2424 = vadd.f32 %v2341, %v2423
  %v2425 = vpop.f32.mrf.mxu0
  %2426 = vdwg.mxu0
  %2427 = vmatprep.subr.mxu0 0.0
  %2428 = vmatpush1.msra.mxu0 0.0
  %2429 = vmatprep.subr.mxu0 0.0
  %2430 = vmatpush1.msra.mxu0 0.0
  %2431 = vmatprep.subr.mxu0 0.0
  %2432 = vmatpush1.msra.mxu0 0.0
  %2433 = vmatprep.subr.mxu0 0.0
  %2434 = vmatpush1.msra.mxu0 0.0
  %2435 = vmatprep.subr.mxu0 0.0
  %2436 = vmatpush1.msra.mxu0 0.0
  %2437 = vmatprep.subr.mxu0 0.0
  %2438 = vmatpush1.msra.mxu0 0.0
  %2439 = vmatprep.subr.mxu0 0.0
  %2440 = vmatpush1.msra.mxu0 0.0
  %2441 = vmatprep.subr.mxu0 0.0
  %2442 = vmatpush1.msra.mxu0 0.0
  %2443 = vmatprep.subr.mxu0 0.0
  %2444 = vmatpush1.msra.mxu0 0.0
  %2445 = vmatprep.subr.mxu0 0.0
  %2446 = vmatpush1.msra.mxu0 0.0
  %2447 = vmatprep.subr.mxu0 0.0
  %2448 = vmatpush1.msra.mxu0 0.0
  %2449 = vmatprep.subr.mxu0 0.0
  %2450 = vmatpush1.msra.mxu0 0.0
  %2451 = vmatprep.subr.mxu0 0.0
  %v2452 = vand.u32 %v2006, 4294901760
  %2453 = vmatpush1.msra.mxu0 %v2452
  %2454 = vmatprep.subr.mxu0 0.0
  %v2455 = vand.u32 %v2005, 4294901760
  %2456 = vmatpush1.msra.mxu0 %v2455
  %2457 = vmatprep.subr.mxu0 0.0
  %v2458 = vand.u32 %v2004, 4294901760
  %2459 = vmatpush1.msra.mxu0 %v2458
  %2460 = vmatprep.subr.mxu0 0.0
  %v2461 = vand.u32 %v2003, 4294901760
  %2462 = vmatpush1.msra.mxu0 %v2461
  %2463 = vmatprep.subr.mxu0 0.0
  %2464 = vmatpush2.msra.mxu0 0.0
  %2465 = vmatprep.subr.mxu0 0.0
  %2466 = vmatpush2.msra.mxu0 0.0
  %2467 = vmatprep.subr.mxu0 0.0
  %2468 = vmatpush2.msra.mxu0 0.0
  %2469 = vmatprep.subr.mxu0 0.0
  %2470 = vmatpush2.msra.mxu0 0.0
  %2471 = vmatprep.subr.mxu0 0.0
  %2472 = vmatpush2.msra.mxu0 0.0
  %2473 = vmatprep.subr.mxu0 0.0
  %2474 = vmatpush2.msra.mxu0 0.0
  %2475 = vmatprep.subr.mxu0 0.0
  %2476 = vmatpush2.msra.mxu0 0.0
  %2477 = vmatprep.subr.mxu0 0.0
  %2478 = vmatpush2.msra.mxu0 0.0
  %2479 = vmatprep.subr.mxu0 0.0
  %2480 = vmatpush2.msra.mxu0 0.0
  %2481 = vmatprep.subr.mxu0 0.0
  %2482 = vmatpush2.msra.mxu0 0.0
  %2483 = vmatprep.subr.mxu0 0.0
  %2484 = vmatpush2.msra.mxu0 0.0
  %2485 = vmatprep.subr.mxu0 0.0
  %2486 = vmatpush2.msra.mxu0 0.0
  %2487 = vmatprep.subr.mxu0 0.0
  %2488 = vmatpush2.msra.mxu0 0.0
  %2489 = vmatprep.subr.mxu0 0.0
  %2490 = vmatpush2.msra.mxu0 0.0
  %2491 = vmatprep.subr.mxu0 0.0
  %2492 = vmatpush2.msra.mxu0 0.0
  %2493 = vmatprep.subr.mxu0 0.0
  %2494 = vmatpush2.msra.mxu0 0.0
  %2495 = vmatprep.mubr.f32.mxu0 0.0
  %v2496 = vand.u32 %v2015, 4294901760
  %2497 = vmatmul.mubr.f32.gmra.mxu0 %v2496
  %v2498 = vpop.f32.mrf.mxu0
  %v2499 = vadd.f32 %v2424, %v2498
  %v2500 = vpop.f32.mrf.mxu0
  %2501 = vdwg.mxu0
  %v2502 = vmax.f32 %v2499, 0.0
  %v2503 = vld [vmem:[%s7] sm:$0xff]
  %v2504 = vld [vmem:[%s7 + $0x8] sm:$0xff]
  %v2505 = vld [vmem:[%s7 + $0x10] sm:$0xff]
  %v2506 = vld [vmem:[%s7 + $0x18] sm:$0xff]
  %v2507 = vld [vmem:[%s7 + $0x20] sm:$0xff]
  %v2508 = vld [vmem:[%s7 + $0x28] sm:$0xff]
  %v2509 = vld [vmem:[%s7 + $0x30] sm:$0xff]
  %v2510 = vld [vmem:[%s7 + $0x38] sm:$0xff]
  %v2511 = vld [vmem:[%s8] sm:$0x1]
  %v2513 = vlaneseq
  %v2514 = vshrl.u32 %v2513, 7
  %v2515 = vsub.s32 0, %v2514
  %v2516 = vrot.slane %v2511, %v2515
  %vm2518 = vcmask 523264
  %v2520 = vsel %vm2518, %v2502, 0
  %2522 = vmatprep.subr.mxu0 0.0
  %2523 = vmatpush1.msra.mxu0 0.0
  %2524 = vmatprep.subr.mxu0 0.0
  %2525 = vmatpush1.msra.mxu0 0.0
  %2526 = vmatprep.subr.mxu0 0.0
  %2527 = vmatpush1.msra.mxu0 0.0
  %2528 = vmatprep.subr.mxu0 0.0
  %2529 = vmatpush1.msra.mxu0 0.0
  %2530 = vmatprep.subr.mxu0 0.0
  %2531 = vmatpush1.msra.mxu0 0.0
  %2532 = vmatprep.subr.mxu0 0.0
  %2533 = vmatpush1.msra.mxu0 0.0
  %2534 = vmatprep.subr.mxu0 0.0
  %2535 = vmatpush1.msra.mxu0 0.0
  %2536 = vmatprep.subr.mxu0 0.0
  %2537 = vmatpush1.msra.mxu0 0.0
  %2538 = vmatprep.subr.mxu0 0.0
  %v2539 = vand.u32 %v2510, 4294901760
  %2540 = vmatpush1.msra.mxu0 %v2539
  %2541 = vmatprep.subr.mxu0 0.0
  %v2542 = vand.u32 %v2509, 4294901760
  %2543 = vmatpush1.msra.mxu0 %v2542
  %2544 = vmatprep.subr.mxu0 0.0
  %v2545 = vand.u32 %v2508, 4294901760
  %2546 = vmatpush1.msra.mxu0 %v2545
  %2547 = vmatprep.subr.mxu0 0.0
  %v2548 = vand.u32 %v2507, 4294901760
  %2549 = vmatpush1.msra.mxu0 %v2548
  %2550 = vmatprep.subr.mxu0 0.0
  %v2551 = vand.u32 %v2506, 4294901760
  %2552 = vmatpush1.msra.mxu0 %v2551
  %2553 = vmatprep.subr.mxu0 0.0
  %v2554 = vand.u32 %v2505, 4294901760
  %2555 = vmatpush1.msra.mxu0 %v2554
  %2556 = vmatprep.subr.mxu0 0.0
  %v2557 = vand.u32 %v2504, 4294901760
  %2558 = vmatpush1.msra.mxu0 %v2557
  %2559 = vmatprep.subr.mxu0 0.0
  %v2560 = vand.u32 %v2503, 4294901760
  %2561 = vmatpush1.msra.mxu0 %v2560
  %2562 = vmatprep.subr.mxu0 0.0
  %2563 = vmatpush2.msra.mxu0 0.0
  %2564 = vmatprep.subr.mxu0 0.0
  %2565 = vmatpush2.msra.mxu0 0.0
  %2566 = vmatprep.subr.mxu0 0.0
  %2567 = vmatpush2.msra.mxu0 0.0
  %2568 = vmatprep.subr.mxu0 0.0
  %2569 = vmatpush2.msra.mxu0 0.0
  %2570 = vmatprep.subr.mxu0 0.0
  %2571 = vmatpush2.msra.mxu0 0.0
  %2572 = vmatprep.subr.mxu0 0.0
  %2573 = vmatpush2.msra.mxu0 0.0
  %2574 = vmatprep.subr.mxu0 0.0
  %2575 = vmatpush2.msra.mxu0 0.0
  %2576 = vmatprep.subr.mxu0 0.0
  %2577 = vmatpush2.msra.mxu0 0.0
  %2578 = vmatprep.subr.mxu0 0.0
  %2579 = vmatpush2.msra.mxu0 0.0
  %2580 = vmatprep.subr.mxu0 0.0
  %2581 = vmatpush2.msra.mxu0 0.0
  %2582 = vmatprep.subr.mxu0 0.0
  %2583 = vmatpush2.msra.mxu0 0.0
  %2584 = vmatprep.subr.mxu0 0.0
  %2585 = vmatpush2.msra.mxu0 0.0
  %2586 = vmatprep.subr.mxu0 0.0
  %2587 = vmatpush2.msra.mxu0 0.0
  %2588 = vmatprep.subr.mxu0 0.0
  %2589 = vmatpush2.msra.mxu0 0.0
  %2590 = vmatprep.subr.mxu0 0.0
  %2591 = vmatpush2.msra.mxu0 0.0
  %2592 = vmatprep.subr.mxu0 0.0
  %2593 = vmatpush2.msra.mxu0 0.0
  %2594 = vmatprep.mubr.f32.mxu0 0.0
  %v2595 = vand.u32 %v2520, 4294901760
  %v2596 = vsub.f32 %v2520, %v2595
  %v2597 = vand.u32 %v2596, 4294901760
  %v2598 = vsub.f32 %v2596, %v2597
  %v2599 = vand.u32 %v2598, 4294901760
  %2600 = vmatmul.mubr.f32.gmra.mxu0 %v2599
  %v2601 = vpop.f32.mrf.mxu0
  %v2602 = vadd.f32 %v2516, %v2601
  %v2603 = vpop.f32.mrf.mxu0
  %2604 = vdwg.mxu0
  %2605 = vmatprep.subr.mxu0 0.0
  %2606 = vmatpush1.msra.mxu0 0.0
  %2607 = vmatprep.subr.mxu0 0.0
  %2608 = vmatpush1.msra.mxu0 0.0
  %2609 = vmatprep.subr.mxu0 0.0
  %2610 = vmatpush1.msra.mxu0 0.0
  %2611 = vmatprep.subr.mxu0 0.0
  %2612 = vmatpush1.msra.mxu0 0.0
  %2613 = vmatprep.subr.mxu0 0.0
  %2614 = vmatpush1.msra.mxu0 0.0
  %2615 = vmatprep.subr.mxu0 0.0
  %2616 = vmatpush1.msra.mxu0 0.0
  %2617 = vmatprep.subr.mxu0 0.0
  %2618 = vmatpush1.msra.mxu0 0.0
  %2619 = vmatprep.subr.mxu0 0.0
  %2620 = vmatpush1.msra.mxu0 0.0
  %2621 = vmatprep.subr.mxu0 0.0
  %v2622 = vand.u32 %v2510, 4294901760
  %v2623 = vsub.f32 %v2510, %v2622
  %v2624 = vand.u32 %v2623, 4294901760
  %v2625 = vsub.f32 %v2623, %v2624
  %v2626 = vand.u32 %v2625, 4294901760
  %2627 = vmatpush1.msra.mxu0 %v2626
  %2628 = vmatprep.subr.mxu0 0.0
  %v2629 = vand.u32 %v2509, 4294901760
  %v2630 = vsub.f32 %v2509, %v2629
  %v2631 = vand.u32 %v2630, 4294901760
  %v2632 = vsub.f32 %v2630, %v2631
  %v2633 = vand.u32 %v2632, 4294901760
  %2634 = vmatpush1.msra.mxu0 %v2633
  %2635 = vmatprep.subr.mxu0 0.0
  %v2636 = vand.u32 %v2508, 4294901760
  %v2637 = vsub.f32 %v2508, %v2636
  %v2638 = vand.u32 %v2637, 4294901760
  %v2639 = vsub.f32 %v2637, %v2638
  %v2640 = vand.u32 %v2639, 4294901760
  %2641 = vmatpush1.msra.mxu0 %v2640
  %2642 = vmatprep.subr.mxu0 0.0
  %v2643 = vand.u32 %v2507, 4294901760
  %v2644 = vsub.f32 %v2507, %v2643
  %v2645 = vand.u32 %v2644, 4294901760
  %v2646 = vsub.f32 %v2644, %v2645
  %v2647 = vand.u32 %v2646, 4294901760
  %2648 = vmatpush1.msra.mxu0 %v2647
  %2649 = vmatprep.subr.mxu0 0.0
  %v2650 = vand.u32 %v2506, 4294901760
  %v2651 = vsub.f32 %v2506, %v2650
  %v2652 = vand.u32 %v2651, 4294901760
  %v2653 = vsub.f32 %v2651, %v2652
  %v2654 = vand.u32 %v2653, 4294901760
  %2655 = vmatpush1.msra.mxu0 %v2654
  %2656 = vmatprep.subr.mxu0 0.0
  %v2657 = vand.u32 %v2505, 4294901760
  %v2658 = vsub.f32 %v2505, %v2657
  %v2659 = vand.u32 %v2658, 4294901760
  %v2660 = vsub.f32 %v2658, %v2659
  %v2661 = vand.u32 %v2660, 4294901760
  %2662 = vmatpush1.msra.mxu0 %v2661
  %2663 = vmatprep.subr.mxu0 0.0
  %v2664 = vand.u32 %v2504, 4294901760
  %v2665 = vsub.f32 %v2504, %v2664
  %v2666 = vand.u32 %v2665, 4294901760
  %v2667 = vsub.f32 %v2665, %v2666
  %v2668 = vand.u32 %v2667, 4294901760
  %2669 = vmatpush1.msra.mxu0 %v2668
  %2670 = vmatprep.subr.mxu0 0.0
  %v2671 = vand.u32 %v2503, 4294901760
  %v2672 = vsub.f32 %v2503, %v2671
  %v2673 = vand.u32 %v2672, 4294901760
  %v2674 = vsub.f32 %v2672, %v2673
  %v2675 = vand.u32 %v2674, 4294901760
  %2676 = vmatpush1.msra.mxu0 %v2675
  %2677 = vmatprep.subr.mxu0 0.0
  %2678 = vmatpush2.msra.mxu0 0.0
  %2679 = vmatprep.subr.mxu0 0.0
  %2680 = vmatpush2.msra.mxu0 0.0
  %2681 = vmatprep.subr.mxu0 0.0
  %2682 = vmatpush2.msra.mxu0 0.0
  %2683 = vmatprep.subr.mxu0 0.0
  %2684 = vmatpush2.msra.mxu0 0.0
  %2685 = vmatprep.subr.mxu0 0.0
  %2686 = vmatpush2.msra.mxu0 0.0
  %2687 = vmatprep.subr.mxu0 0.0
  %2688 = vmatpush2.msra.mxu0 0.0
  %2689 = vmatprep.subr.mxu0 0.0
  %2690 = vmatpush2.msra.mxu0 0.0
  %2691 = vmatprep.subr.mxu0 0.0
  %2692 = vmatpush2.msra.mxu0 0.0
  %2693 = vmatprep.subr.mxu0 0.0
  %2694 = vmatpush2.msra.mxu0 0.0
  %2695 = vmatprep.subr.mxu0 0.0
  %2696 = vmatpush2.msra.mxu0 0.0
  %2697 = vmatprep.subr.mxu0 0.0
  %2698 = vmatpush2.msra.mxu0 0.0
  %2699 = vmatprep.subr.mxu0 0.0
  %2700 = vmatpush2.msra.mxu0 0.0
  %2701 = vmatprep.subr.mxu0 0.0
  %2702 = vmatpush2.msra.mxu0 0.0
  %2703 = vmatprep.subr.mxu0 0.0
  %2704 = vmatpush2.msra.mxu0 0.0
  %2705 = vmatprep.subr.mxu0 0.0
  %2706 = vmatpush2.msra.mxu0 0.0
  %2707 = vmatprep.subr.mxu0 0.0
  %2708 = vmatpush2.msra.mxu0 0.0
  %2709 = vmatprep.mubr.f32.mxu0 0.0
  %v2710 = vand.u32 %v2520, 4294901760
  %2711 = vmatmul.mubr.f32.gmra.mxu0 %v2710
  %v2712 = vpop.f32.mrf.mxu0
  %v2713 = vadd.f32 %v2602, %v2712
  %v2714 = vpop.f32.mrf.mxu0
  %2715 = vdwg.mxu0
  %2716 = vmatprep.subr.mxu0 0.0
  %2717 = vmatpush1.msra.mxu0 0.0
  %2718 = vmatprep.subr.mxu0 0.0
  %2719 = vmatpush1.msra.mxu0 0.0
  %2720 = vmatprep.subr.mxu0 0.0
  %2721 = vmatpush1.msra.mxu0 0.0
  %2722 = vmatprep.subr.mxu0 0.0
  %2723 = vmatpush1.msra.mxu0 0.0
  %2724 = vmatprep.subr.mxu0 0.0
  %2725 = vmatpush1.msra.mxu0 0.0
  %2726 = vmatprep.subr.mxu0 0.0
  %2727 = vmatpush1.msra.mxu0 0.0
  %2728 = vmatprep.subr.mxu0 0.0
  %2729 = vmatpush1.msra.mxu0 0.0
  %2730 = vmatprep.subr.mxu0 0.0
  %2731 = vmatpush1.msra.mxu0 0.0
  %2732 = vmatprep.subr.mxu0 0.0
  %v2733 = vand.u32 %v2510, 4294901760
  %v2734 = vsub.f32 %v2510, %v2733
  %2735 = vmatpush1.msra.mxu0 %v2734
  %2736 = vmatprep.subr.mxu0 0.0
  %v2737 = vand.u32 %v2509, 4294901760
  %v2738 = vsub.f32 %v2509, %v2737
  %2739 = vmatpush1.msra.mxu0 %v2738
  %2740 = vmatprep.subr.mxu0 0.0
  %v2741 = vand.u32 %v2508, 4294901760
  %v2742 = vsub.f32 %v2508, %v2741
  %2743 = vmatpush1.msra.mxu0 %v2742
  %2744 = vmatprep.subr.mxu0 0.0
  %v2745 = vand.u32 %v2507, 4294901760
  %v2746 = vsub.f32 %v2507, %v2745
  %2747 = vmatpush1.msra.mxu0 %v2746
  %2748 = vmatprep.subr.mxu0 0.0
  %v2749 = vand.u32 %v2506, 4294901760
  %v2750 = vsub.f32 %v2506, %v2749
  %2751 = vmatpush1.msra.mxu0 %v2750
  %2752 = vmatprep.subr.mxu0 0.0
  %v2753 = vand.u32 %v2505, 4294901760
  %v2754 = vsub.f32 %v2505, %v2753
  %2755 = vmatpush1.msra.mxu0 %v2754
  %2756 = vmatprep.subr.mxu0 0.0
  %v2757 = vand.u32 %v2504, 4294901760
  %v2758 = vsub.f32 %v2504, %v2757
  %2759 = vmatpush1.msra.mxu0 %v2758
  %2760 = vmatprep.subr.mxu0 0.0
  %v2761 = vand.u32 %v2503, 4294901760
  %v2762 = vsub.f32 %v2503, %v2761
  %2763 = vmatpush1.msra.mxu0 %v2762
  %2764 = vmatprep.subr.mxu0 0.0
  %2765 = vmatpush2.msra.mxu0 0.0
  %2766 = vmatprep.subr.mxu0 0.0
  %2767 = vmatpush2.msra.mxu0 0.0
  %2768 = vmatprep.subr.mxu0 0.0
  %2769 = vmatpush2.msra.mxu0 0.0
  %2770 = vmatprep.subr.mxu0 0.0
  %2771 = vmatpush2.msra.mxu0 0.0
  %2772 = vmatprep.subr.mxu0 0.0
  %2773 = vmatpush2.msra.mxu0 0.0
  %2774 = vmatprep.subr.mxu0 0.0
  %2775 = vmatpush2.msra.mxu0 0.0
  %2776 = vmatprep.subr.mxu0 0.0
  %2777 = vmatpush2.msra.mxu0 0.0
  %2778 = vmatprep.subr.mxu0 0.0
  %2779 = vmatpush2.msra.mxu0 0.0
  %2780 = vmatprep.subr.mxu0 0.0
  %2781 = vmatpush2.msra.mxu0 0.0
  %2782 = vmatprep.subr.mxu0 0.0
  %2783 = vmatpush2.msra.mxu0 0.0
  %2784 = vmatprep.subr.mxu0 0.0
  %2785 = vmatpush2.msra.mxu0 0.0
  %2786 = vmatprep.subr.mxu0 0.0
  %2787 = vmatpush2.msra.mxu0 0.0
  %2788 = vmatprep.subr.mxu0 0.0
  %2789 = vmatpush2.msra.mxu0 0.0
  %2790 = vmatprep.subr.mxu0 0.0
  %2791 = vmatpush2.msra.mxu0 0.0
  %2792 = vmatprep.subr.mxu0 0.0
  %2793 = vmatpush2.msra.mxu0 0.0
  %2794 = vmatprep.subr.mxu0 0.0
  %2795 = vmatpush2.msra.mxu0 0.0
  %2796 = vmatprep.mubr.f32.mxu0 0.0
  %v2797 = vand.u32 %v2520, 4294901760
  %v2798 = vsub.f32 %v2520, %v2797
  %2799 = vmatmul.mubr.f32.gmra.mxu0 %v2798
  %v2800 = vpop.f32.mrf.mxu0
  %v2801 = vadd.f32 %v2713, %v2800
  %v2802 = vpop.f32.mrf.mxu0
  %2803 = vdwg.mxu0
  %2804 = vmatprep.subr.mxu0 0.0
  %2805 = vmatpush1.msra.mxu0 0.0
  %2806 = vmatprep.subr.mxu0 0.0
  %2807 = vmatpush1.msra.mxu0 0.0
  %2808 = vmatprep.subr.mxu0 0.0
  %2809 = vmatpush1.msra.mxu0 0.0
  %2810 = vmatprep.subr.mxu0 0.0
  %2811 = vmatpush1.msra.mxu0 0.0
  %2812 = vmatprep.subr.mxu0 0.0
  %2813 = vmatpush1.msra.mxu0 0.0
  %2814 = vmatprep.subr.mxu0 0.0
  %2815 = vmatpush1.msra.mxu0 0.0
  %2816 = vmatprep.subr.mxu0 0.0
  %2817 = vmatpush1.msra.mxu0 0.0
  %2818 = vmatprep.subr.mxu0 0.0
  %2819 = vmatpush1.msra.mxu0 0.0
  %2820 = vmatprep.subr.mxu0 0.0
  %v2821 = vand.u32 %v2510, 4294901760
  %2822 = vmatpush1.msra.mxu0 %v2821
  %2823 = vmatprep.subr.mxu0 0.0
  %v2824 = vand.u32 %v2509, 4294901760
  %2825 = vmatpush1.msra.mxu0 %v2824
  %2826 = vmatprep.subr.mxu0 0.0
  %v2827 = vand.u32 %v2508, 4294901760
  %2828 = vmatpush1.msra.mxu0 %v2827
  %2829 = vmatprep.subr.mxu0 0.0
  %v2830 = vand.u32 %v2507, 4294901760
  %2831 = vmatpush1.msra.mxu0 %v2830
  %2832 = vmatprep.subr.mxu0 0.0
  %v2833 = vand.u32 %v2506, 4294901760
  %2834 = vmatpush1.msra.mxu0 %v2833
  %2835 = vmatprep.subr.mxu0 0.0
  %v2836 = vand.u32 %v2505, 4294901760
  %2837 = vmatpush1.msra.mxu0 %v2836
  %2838 = vmatprep.subr.mxu0 0.0
  %v2839 = vand.u32 %v2504, 4294901760
  %2840 = vmatpush1.msra.mxu0 %v2839
  %2841 = vmatprep.subr.mxu0 0.0
  %v2842 = vand.u32 %v2503, 4294901760
  %2843 = vmatpush1.msra.mxu0 %v2842
  %2844 = vmatprep.subr.mxu0 0.0
  %2845 = vmatpush2.msra.mxu0 0.0
  %2846 = vmatprep.subr.mxu0 0.0
  %2847 = vmatpush2.msra.mxu0 0.0
  %2848 = vmatprep.subr.mxu0 0.0
  %2849 = vmatpush2.msra.mxu0 0.0
  %2850 = vmatprep.subr.mxu0 0.0
  %2851 = vmatpush2.msra.mxu0 0.0
  %2852 = vmatprep.subr.mxu0 0.0
  %2853 = vmatpush2.msra.mxu0 0.0
  %2854 = vmatprep.subr.mxu0 0.0
  %2855 = vmatpush2.msra.mxu0 0.0
  %2856 = vmatprep.subr.mxu0 0.0
  %2857 = vmatpush2.msra.mxu0 0.0
  %2858 = vmatprep.subr.mxu0 0.0
  %2859 = vmatpush2.msra.mxu0 0.0
  %2860 = vmatprep.subr.mxu0 0.0
  %2861 = vmatpush2.msra.mxu0 0.0
  %2862 = vmatprep.subr.mxu0 0.0
  %2863 = vmatpush2.msra.mxu0 0.0
  %2864 = vmatprep.subr.mxu0 0.0
  %2865 = vmatpush2.msra.mxu0 0.0
  %2866 = vmatprep.subr.mxu0 0.0
  %2867 = vmatpush2.msra.mxu0 0.0
  %2868 = vmatprep.subr.mxu0 0.0
  %2869 = vmatpush2.msra.mxu0 0.0
  %2870 = vmatprep.subr.mxu0 0.0
  %2871 = vmatpush2.msra.mxu0 0.0
  %2872 = vmatprep.subr.mxu0 0.0
  %2873 = vmatpush2.msra.mxu0 0.0
  %2874 = vmatprep.subr.mxu0 0.0
  %2875 = vmatpush2.msra.mxu0 0.0
  %2876 = vmatprep.mubr.f32.mxu0 0.0
  %v2877 = vand.u32 %v2520, 4294901760
  %v2878 = vsub.f32 %v2520, %v2877
  %v2879 = vand.u32 %v2878, 4294901760
  %2880 = vmatmul.mubr.f32.gmra.mxu0 %v2879
  %v2881 = vpop.f32.mrf.mxu0
  %v2882 = vadd.f32 %v2801, %v2881
  %v2883 = vpop.f32.mrf.mxu0
  %2884 = vdwg.mxu0
  %2885 = vmatprep.subr.mxu0 0.0
  %2886 = vmatpush1.msra.mxu0 0.0
  %2887 = vmatprep.subr.mxu0 0.0
  %2888 = vmatpush1.msra.mxu0 0.0
  %2889 = vmatprep.subr.mxu0 0.0
  %2890 = vmatpush1.msra.mxu0 0.0
  %2891 = vmatprep.subr.mxu0 0.0
  %2892 = vmatpush1.msra.mxu0 0.0
  %2893 = vmatprep.subr.mxu0 0.0
  %2894 = vmatpush1.msra.mxu0 0.0
  %2895 = vmatprep.subr.mxu0 0.0
  %2896 = vmatpush1.msra.mxu0 0.0
  %2897 = vmatprep.subr.mxu0 0.0
  %2898 = vmatpush1.msra.mxu0 0.0
  %2899 = vmatprep.subr.mxu0 0.0
  %2900 = vmatpush1.msra.mxu0 0.0
  %2901 = vmatprep.subr.mxu0 0.0
  %v2902 = vand.u32 %v2510, 4294901760
  %v2903 = vsub.f32 %v2510, %v2902
  %v2904 = vand.u32 %v2903, 4294901760
  %2905 = vmatpush1.msra.mxu0 %v2904
  %2906 = vmatprep.subr.mxu0 0.0
  %v2907 = vand.u32 %v2509, 4294901760
  %v2908 = vsub.f32 %v2509, %v2907
  %v2909 = vand.u32 %v2908, 4294901760
  %2910 = vmatpush1.msra.mxu0 %v2909
  %2911 = vmatprep.subr.mxu0 0.0
  %v2912 = vand.u32 %v2508, 4294901760
  %v2913 = vsub.f32 %v2508, %v2912
  %v2914 = vand.u32 %v2913, 4294901760
  %2915 = vmatpush1.msra.mxu0 %v2914
  %2916 = vmatprep.subr.mxu0 0.0
  %v2917 = vand.u32 %v2507, 4294901760
  %v2918 = vsub.f32 %v2507, %v2917
  %v2919 = vand.u32 %v2918, 4294901760
  %2920 = vmatpush1.msra.mxu0 %v2919
  %2921 = vmatprep.subr.mxu0 0.0
  %v2922 = vand.u32 %v2506, 4294901760
  %v2923 = vsub.f32 %v2506, %v2922
  %v2924 = vand.u32 %v2923, 4294901760
  %2925 = vmatpush1.msra.mxu0 %v2924
  %2926 = vmatprep.subr.mxu0 0.0
  %v2927 = vand.u32 %v2505, 4294901760
  %v2928 = vsub.f32 %v2505, %v2927
  %v2929 = vand.u32 %v2928, 4294901760
  %2930 = vmatpush1.msra.mxu0 %v2929
  %2931 = vmatprep.subr.mxu0 0.0
  %v2932 = vand.u32 %v2504, 4294901760
  %v2933 = vsub.f32 %v2504, %v2932
  %v2934 = vand.u32 %v2933, 4294901760
  %2935 = vmatpush1.msra.mxu0 %v2934
  %2936 = vmatprep.subr.mxu0 0.0
  %v2937 = vand.u32 %v2503, 4294901760
  %v2938 = vsub.f32 %v2503, %v2937
  %v2939 = vand.u32 %v2938, 4294901760
  %2940 = vmatpush1.msra.mxu0 %v2939
  %2941 = vmatprep.subr.mxu0 0.0
  %2942 = vmatpush2.msra.mxu0 0.0
  %2943 = vmatprep.subr.mxu0 0.0
  %2944 = vmatpush2.msra.mxu0 0.0
  %2945 = vmatprep.subr.mxu0 0.0
  %2946 = vmatpush2.msra.mxu0 0.0
  %2947 = vmatprep.subr.mxu0 0.0
  %2948 = vmatpush2.msra.mxu0 0.0
  %2949 = vmatprep.subr.mxu0 0.0
  %2950 = vmatpush2.msra.mxu0 0.0
  %2951 = vmatprep.subr.mxu0 0.0
  %2952 = vmatpush2.msra.mxu0 0.0
  %2953 = vmatprep.subr.mxu0 0.0
  %2954 = vmatpush2.msra.mxu0 0.0
  %2955 = vmatprep.subr.mxu0 0.0
  %2956 = vmatpush2.msra.mxu0 0.0
  %2957 = vmatprep.subr.mxu0 0.0
  %2958 = vmatpush2.msra.mxu0 0.0
  %2959 = vmatprep.subr.mxu0 0.0
  %2960 = vmatpush2.msra.mxu0 0.0
  %2961 = vmatprep.subr.mxu0 0.0
  %2962 = vmatpush2.msra.mxu0 0.0
  %2963 = vmatprep.subr.mxu0 0.0
  %2964 = vmatpush2.msra.mxu0 0.0
  %2965 = vmatprep.subr.mxu0 0.0
  %2966 = vmatpush2.msra.mxu0 0.0
  %2967 = vmatprep.subr.mxu0 0.0
  %2968 = vmatpush2.msra.mxu0 0.0
  %2969 = vmatprep.subr.mxu0 0.0
  %2970 = vmatpush2.msra.mxu0 0.0
  %2971 = vmatprep.subr.mxu0 0.0
  %2972 = vmatpush2.msra.mxu0 0.0
  %2973 = vmatprep.mubr.f32.mxu0 0.0
  %v2974 = vand.u32 %v2520, 4294901760
  %2975 = vmatmul.mubr.f32.gmra.mxu0 %v2974
  %v2976 = vpop.f32.mrf.mxu0
  %v2977 = vadd.f32 %v2882, %v2976
  %v2978 = vpop.f32.mrf.mxu0
  %2979 = vdwg.mxu0
  %2980 = vmatprep.subr.mxu0 0.0
  %2981 = vmatpush1.msra.mxu0 0.0
  %2982 = vmatprep.subr.mxu0 0.0
  %2983 = vmatpush1.msra.mxu0 0.0
  %2984 = vmatprep.subr.mxu0 0.0
  %2985 = vmatpush1.msra.mxu0 0.0
  %2986 = vmatprep.subr.mxu0 0.0
  %2987 = vmatpush1.msra.mxu0 0.0
  %2988 = vmatprep.subr.mxu0 0.0
  %2989 = vmatpush1.msra.mxu0 0.0
  %2990 = vmatprep.subr.mxu0 0.0
  %2991 = vmatpush1.msra.mxu0 0.0
  %2992 = vmatprep.subr.mxu0 0.0
  %2993 = vmatpush1.msra.mxu0 0.0
  %2994 = vmatprep.subr.mxu0 0.0
  %2995 = vmatpush1.msra.mxu0 0.0
  %2996 = vmatprep.subr.mxu0 0.0
  %v2997 = vand.u32 %v2510, 4294901760
  %2998 = vmatpush1.msra.mxu0 %v2997
  %2999 = vmatprep.subr.mxu0 0.0
  %v3000 = vand.u32 %v2509, 4294901760
  %3001 = vmatpush1.msra.mxu0 %v3000
  %3002 = vmatprep.subr.mxu0 0.0
  %v3003 = vand.u32 %v2508, 4294901760
  %3004 = vmatpush1.msra.mxu0 %v3003
  %3005 = vmatprep.subr.mxu0 0.0
  %v3006 = vand.u32 %v2507, 4294901760
  %3007 = vmatpush1.msra.mxu0 %v3006
  %3008 = vmatprep.subr.mxu0 0.0
  %v3009 = vand.u32 %v2506, 4294901760
  %3010 = vmatpush1.msra.mxu0 %v3009
  %3011 = vmatprep.subr.mxu0 0.0
  %v3012 = vand.u32 %v2505, 4294901760
  %3013 = vmatpush1.msra.mxu0 %v3012
  %3014 = vmatprep.subr.mxu0 0.0
  %v3015 = vand.u32 %v2504, 4294901760
  %3016 = vmatpush1.msra.mxu0 %v3015
  %3017 = vmatprep.subr.mxu0 0.0
  %v3018 = vand.u32 %v2503, 4294901760
  %3019 = vmatpush1.msra.mxu0 %v3018
  %3020 = vmatprep.subr.mxu0 0.0
  %3021 = vmatpush2.msra.mxu0 0.0
  %3022 = vmatprep.subr.mxu0 0.0
  %3023 = vmatpush2.msra.mxu0 0.0
  %3024 = vmatprep.subr.mxu0 0.0
  %3025 = vmatpush2.msra.mxu0 0.0
  %3026 = vmatprep.subr.mxu0 0.0
  %3027 = vmatpush2.msra.mxu0 0.0
  %3028 = vmatprep.subr.mxu0 0.0
  %3029 = vmatpush2.msra.mxu0 0.0
  %3030 = vmatprep.subr.mxu0 0.0
  %3031 = vmatpush2.msra.mxu0 0.0
  %3032 = vmatprep.subr.mxu0 0.0
  %3033 = vmatpush2.msra.mxu0 0.0
  %3034 = vmatprep.subr.mxu0 0.0
  %3035 = vmatpush2.msra.mxu0 0.0
  %3036 = vmatprep.subr.mxu0 0.0
  %3037 = vmatpush2.msra.mxu0 0.0
  %3038 = vmatprep.subr.mxu0 0.0
  %3039 = vmatpush2.msra.mxu0 0.0
  %3040 = vmatprep.subr.mxu0 0.0
  %3041 = vmatpush2.msra.mxu0 0.0
  %3042 = vmatprep.subr.mxu0 0.0
  %3043 = vmatpush2.msra.mxu0 0.0
  %3044 = vmatprep.subr.mxu0 0.0
  %3045 = vmatpush2.msra.mxu0 0.0
  %3046 = vmatprep.subr.mxu0 0.0
  %3047 = vmatpush2.msra.mxu0 0.0
  %3048 = vmatprep.subr.mxu0 0.0
  %3049 = vmatpush2.msra.mxu0 0.0
  %3050 = vmatprep.subr.mxu0 0.0
  %3051 = vmatpush2.msra.mxu0 0.0
  %3052 = vmatprep.mubr.f32.mxu0 0.0
  %v3053 = vand.u32 %v2520, 4294901760
  %3054 = vmatmul.mubr.f32.gmra.mxu0 %v3053
  %v3055 = vpop.f32.mrf.mxu0
  %v3056 = vadd.f32 %v2977, %v3055
  %v3057 = vpop.f32.mrf.mxu0
  %3058 = vdwg.mxu0
  %3059 = vst [vmem:[%s9] sm:$0xff] %v3056
  // Predicated region
  $region38: #{critic_forward.1} parent=0 // pred_check
    _
  $region39: #{critic_forward.1} parent=0 // pred_check_branch
    %3061 = sbr.rel (0) target = $region41
  $region40: #{critic_forward.1} parent=0 // pred_region
    _
  $region41: #{critic_forward.1} parent=0 // pred_fallthru
    _
  // Predicated region
  $region42: #{critic_forward.1} parent=0 // pred_check
    _
  $region43: #{critic_forward.1} parent=0 // pred_check_branch
    %3063 = sbr.rel (0) target = $region45
  $region44: #{critic_forward.1} parent=0 // pred_region
    _
  $region45: #{critic_forward.1} parent=0 // pred_fallthru
    _

</llo_original>
